<compile_context>
chip_gen: v7x
topology: tpu7x:2x2x1
jax: 0.10.0
libtpu: 0.0.40
codegen_flags: <defaults>
</compile_context>

<pallas_src>
import functools
import numpy as np
import jax
import jax.numpy as jnp
from jax import lax
from jax.experimental import pallas as pl
from jax.experimental.pallas import tpu as pltpu

# ---------------- hyperparameters (mirror the torch module ctor args) ---------
IN_CHANNELS = 4
OUT_CHANNELS = [8, 16]
KERNEL_SIZES = [4, 3]
STRIDES = [2, 2]
FEATURES_OUT = 32          # LSTM hidden size (Hd)
ACT_DIM = 6                # Discrete action space (actor_head output)
IMG_HW = (16, 16)
BATCH = 2

FLAT_IN = IN_CHANNELS * IMG_HW[0] * IMG_HW[1]      # 1024 (already lane-aligned)
GATE_LANES = 128           # one 128-lane slab per LSTM gate (gate lives in lanes [0:Hd))
GATES_W = 4 * GATE_LANES   # 512
HEAD_WIDTH = 128           # packed actor(6) + critic(1) output slab
USE_BF16 = False           # v6e/v7x: True halves weight bytes & uses native bf16 MXU
                           # (accumulation stays f32); re-validate tolerances if enabled.


def _round_up(n, m):
    return ((n + m - 1) // m) * m


def conv_out_hw(hw, k, s):
    return ((hw[0] - k) // s + 1, (hw[1] - k) // s + 1)


# geometry derived from ctor args
_HO1, _WO1 = conv_out_hw(IMG_HW, KERNEL_SIZES[0], STRIDES[0])        # 7, 7
_HO2, _WO2 = conv_out_hw((_HO1, _WO1), KERNEL_SIZES[1], STRIDES[1])  # 3, 3
N1 = OUT_CHANNELS[0] * _HO1 * _WO1      # 392
N2 = OUT_CHANNELS[1] * _HO2 * _WO2      # 144  (== LSTM input F)
N1P = _round_up(N1, 256)                # 512  (lane/MXU-N aligned)
N2P = _round_up(N2, 256)                # 256


# ---------------- the single fused Pallas kernel -------------------------------
def _fused_forward_kernel(x_ref, w1_ref, b1_ref, w2_ref, b2_ref,
                          wih_ref, bl_ref, wh_ref, bh_ref, out_ref):
    """Conv1+ReLU -> Conv2+ReLU -> flatten -> single-step LSTM (h0=c0=0) ->
    packed actor/critic heads for one (TB, FLAT_IN) batch tile.

    Every intermediate width is a multiple of 128 lanes, so there are no masked
    vector ops, no intra-vreg lane relayouts, and one unmasked (TB, 128) store.
    All intermediates stay in VMEM/vregs; convs arrive pre-folded as dense
    matrices whose output columns are already in torch nn.Flatten (C,H,W) order.
    """
    wdt = w1_ref.dtype
    x = x_ref[...]                                                     # (TB, 1024)

    # conv1 + ReLU  (dense-folded, output columns zero-padded 392 -> 512)
    y1 = jnp.dot(x.astype(wdt), w1_ref[...],
                 preferred_element_type=jnp.float32) + b1_ref[...]
    y1 = jnp.maximum(y1, 0.0)                                          # (TB, 512)

    # conv2 + ReLU  (columns == torch Flatten order, zero-padded 144 -> 256)
    y2 = jnp.dot(y1.astype(wdt), w2_ref[...],
                 preferred_element_type=jnp.float32) + b2_ref[...]
    feat = jnp.maximum(y2, 0.0)                                        # (TB, 256)

    # Single LSTM step with h0 = c0 = 0 (reset_hidden_states): the h0 @ W_hh^T
    # and f*c0 terms are exactly zero, so only the i/g/o gates are needed.
    # Gates are packed gate-major (one 128-lane slab each), so each slice below
    # is a whole-vreg select.
    gates = jnp.dot(feat.astype(wdt), wih_ref[...],
                    preferred_element_type=jnp.float32) + bl_ref[...]  # (TB, 512)
    i_g = jax.nn.sigmoid(gates[:, 0 * GATE_LANES:1 * GATE_LANES])
    g_g = jnp.tanh(gates[:, 2 * GATE_LANES:3 * GATE_LANES])
    o_g = jax.nn.sigmoid(gates[:, 3 * GATE_LANES:4 * GATE_LANES])
    # Padded lanes: g_g = tanh(0) = 0 -> h is exactly 0 there; w_heads' zero
    # rows [Hd:128) annihilate them regardless.
    h = o_g * jnp.tanh(i_g * g_g)                                      # (TB, 128)

    # Actor + critic heads packed into one lane-dense (TB, 128) unmasked store.
    out_ref[...] = jnp.dot(h.astype(wdt), wh_ref[...],
                           preferred_element_type=jnp.float32) + bh_ref[...]


# ---------------- pallas_call wrapper ------------------------------------------
def _batch_tile(b_pad):
    # One grid step per MXU-height LHS tile: 256 fills the v6e/v7x 256x256 MXU
    # (use 128 on v5e).  Tiny latency-path batches (<= 256 rows) run as a single
    # padded tile, i.e. one grid step for the whole forward.
    return b_pad if b_pad <= 256 else 256


def forward(params, obs_nchw):
    B = obs_nchw.shape[0]
    x = obs_nchw.reshape(B, FLAT_IN)                  # metadata-only CHW flatten

    b_pad = _round_up(max(B, 8), 8)
    tb = _batch_tile(b_pad)
    b_pad = _round_up(b_pad, tb)
    if b_pad != B:
        x = jnp.pad(x, ((0, b_pad - B), (0, 0)))

    weight_args = (params['w1'], params['b1'], params['w2'], params['b2'],
                   params['w_ih'], params['b_lstm'], params['w_heads'], params['b_heads'])

    def _const_spec(arr):
        nd = arr.ndim
        # Constant index_map: weight block is identical across grid steps, so it
        # is DMA'd into VMEM once.  (Could also be single-buffered via
        # pipeline_mode=pl.Buffered(1) to halve the weight VMEM allocation.)
        return pl.BlockSpec(arr.shape, lambda b, _nd=nd: (0,) * _nd)

    in_specs = ([pl.BlockSpec((tb, FLAT_IN), lambda b: (b, 0))]
                + [_const_spec(w) for w in weight_args])

    wbytes = sum(int(np.prod(w.shape)) * w.dtype.itemsize for w in weight_args)
    cost = pl.CostEstimate(
        flops=2 * b_pad * (FLAT_IN * N1P + N1P * N2P + N2P * GATES_W
                           + GATE_LANES * HEAD_WIDTH),
        transcendentals=4 * b_pad * GATE_LANES,
        bytes_accessed=4 * b_pad * (FLAT_IN + HEAD_WIDTH) + wbytes,
    )

    out = pl.pallas_call(
        _fused_forward_kernel,
        grid=(b_pad // tb,),
        in_specs=in_specs,
        out_specs=pl.BlockSpec((tb, HEAD_WIDTH), lambda b: (b, 0)),
        out_shape=jax.ShapeDtypeStruct((b_pad, HEAD_WIDTH), jnp.float32),
        compiler_params=pltpu.CompilerParams(dimension_semantics=("parallel",)),
        cost_estimate=cost,
    )(x, *weight_args)

    act = out[:B, :ACT_DIM]
    val = out[:B, ACT_DIM:ACT_DIM + 1]
    return act, val


# ---------------- init-time parameter construction & folding --------------------
def init_raw_params(key):
    """Deterministic params in native torch layouts (Conv OIHW, Linear (out,in))."""
    C1, C2 = OUT_CHANNELS
    K1, K2 = KERNEL_SIZES
    F = N2
    Hd = FEATURES_OUT
    ks = jax.random.split(key, 12)

    def u(k, shape, fan_in):
        b = 1.0 / np.sqrt(fan_in)
        return jax.random.uniform(k, shape, jnp.float32, -b, b)

    return dict(
        w1=u(ks[0], (C1, IN_CHANNELS, K1, K1), IN_CHANNELS * K1 * K1),
        b1=u(ks[1], (C1,), IN_CHANNELS * K1 * K1),
        w2=u(ks[2], (C2, C1, K2, K2), C1 * K2 * K2),
        b2=u(ks[3], (C2,), C1 * K2 * K2),
        w_ih=u(ks[4], (4 * Hd, F), Hd),      # torch gate order [i|f|g|o]
        w_hh=u(ks[5], (4 * Hd, Hd), Hd),     # unused in forward() (h0 == 0)
        b_ih=u(ks[6], (4 * Hd,), Hd),
        b_hh=u(ks[7], (4 * Hd,), Hd),
        w_a=u(ks[8], (ACT_DIM, Hd), Hd),
        b_a=u(ks[9], (ACT_DIM,), Hd),
        w_c=u(ks[10], (1, Hd), Hd),
        b_c=u(ks[11], (1,), Hd),
    )


def _conv_as_dense(w_oihw, b_o, in_h, in_w, stride):
    """Fold a VALID strided Conv2d into a dense (Cin*H*W, Cout*Ho*Wo) matrix.

    Row index = CHW-flat input position; column index = CHW-flat output position,
    i.e. exactly torch nn.Flatten order, so downstream layers need no permutation.
    """
    w = np.asarray(w_oihw, np.float32)
    b = np.asarray(b_o, np.float32)
    cout, cin, kh, kw = w.shape
    oh = (in_h - kh) // stride + 1
    ow = (in_w - kw) // stride + 1
    dense = np.zeros((cin * in_h * in_w, cout * oh * ow), np.float32)
    for co in range(cout):
        for i in range(oh):
            for j in range(ow):
                col = (co * oh + i) * ow + j
                for c in range(cin):
                    for dh in range(kh):
                        for dw in range(kw):
                            row = (c * in_h + i * stride + dh) * in_w + j * stride + dw
                            dense[row, col] = w[co, c, dh, dw]
    b_rep = np.repeat(b, oh * ow)[None, :]
    return dense, b_rep, oh, ow


def fold_params(raw):
    """Fold torch-layout params into lane-aligned dense kernel weights.

    W_hh / forget gate are dropped ONLY because forward() resets (h0, c0) to
    zero on every call; this folded set must not be used for stateful rollouts.
    """
    Hd = FEATURES_OUT
    w1d, b1r, ho1, wo1 = _conv_as_dense(raw['w1'], raw['b1'], IMG_HW[0], IMG_HW[1], STRIDES[0])
    w2d, b2r, ho2, wo2 = _conv_as_dense(raw['w2'], raw['b2'], ho1, wo1, STRIDES[1])
    assert w1d.shape == (FLAT_IN, N1) and w2d.shape == (N1, N2)

    # Zero-pad conv output columns to 128-lane multiples; padded columns of one
    # layer hit zero rows of the next layer, so results are unchanged.
    w1p = np.zeros((FLAT_IN, N1P), np.float32); w1p[:, :N1] = w1d
    b1p = np.zeros((1, N1P), np.float32);       b1p[:, :N1] = b1r
    w2p = np.zeros((N1P, N2P), np.float32);     w2p[:N1, :N2] = w2d
    b2p = np.zeros((1, N2P), np.float32);       b2p[:, :N2] = b2r

    # LSTM input weights repacked gate-major: gate k (torch order i,f,g,o)
    # occupies lanes [128k, 128k + Hd), so in-kernel gate slices are whole vregs.
    w_ih_t = np.asarray(raw['w_ih'], np.float32).T                     # (F, 4*Hd)
    b_sum = np.asarray(raw['b_ih'], np.float32) + np.asarray(raw['b_hh'], np.float32)
    w_ihp = np.zeros((N2P, GATES_W), np.float32)
    b_lp = np.zeros((1, GATES_W), np.float32)
    for k in range(4):
        w_ihp[:N2, k * GATE_LANES:k * GATE_LANES + Hd] = w_ih_t[:, k * Hd:(k + 1) * Hd]
        b_lp[0, k * GATE_LANES:k * GATE_LANES + Hd] = b_sum[k * Hd:(k + 1) * Hd]

    # Actor + critic packed into one (128, 128) slab: cols [0:ACT_DIM] = actor
    # logits, col ACT_DIM = value; rows [Hd:128) zero so padded h lanes vanish.
    w_heads = np.zeros((GATE_LANES, HEAD_WIDTH), np.float32)
    b_heads = np.zeros((1, HEAD_WIDTH), np.float32)
    w_heads[:Hd, :ACT_DIM] = np.asarray(raw['w_a'], np.float32).T
    w_heads[:Hd, ACT_DIM] = np.asarray(raw['w_c'], np.float32)[0]
    b_heads[0, :ACT_DIM] = np.asarray(raw['b_a'], np.float32)
    b_heads[0, ACT_DIM] = np.asarray(raw['b_c'], np.float32)[0]

    wdt = jnp.bfloat16 if USE_BF16 else jnp.float32
    return dict(
        w1=jnp.asarray(w1p, wdt), b1=jnp.asarray(b1p),
        w2=jnp.asarray(w2p, wdt), b2=jnp.asarray(b2p),
        w_ih=jnp.asarray(w_ihp, wdt), b_lstm=jnp.asarray(b_lp),
        w_heads=jnp.asarray(w_heads, wdt), b_heads=jnp.asarray(b_heads),
    )


# ---------------- pure-JAX reference of the torch forward() ---------------------
def reference_forward(raw, obs_nchw):
    hi = lax.Precision.HIGHEST
    dn = ('NCHW', 'OIHW', 'NCHW')
    y = lax.conv_general_dilated(obs_nchw, raw['w1'], (STRIDES[0],) * 2, 'VALID',
                                 dimension_numbers=dn, precision=hi)
    y = jnp.maximum(y + raw['b1'][None, :, None, None], 0.0)
    y = lax.conv_general_dilated(y, raw['w2'], (STRIDES[1],) * 2, 'VALID',
                                 dimension_numbers=dn, precision=hi)
    y = jnp.maximum(y + raw['b2'][None, :, None, None], 0.0)
    feat = y.reshape(y.shape[0], -1)                                   # torch nn.Flatten

    B, H = feat.shape[0], FEATURES_OUT
    h0 = jnp.zeros((B, H), jnp.float32)
    c0 = jnp.zeros((B, H), jnp.float32)
    gates = (jnp.dot(feat, raw['w_ih'].T, precision=hi)
             + jnp.dot(h0, raw['w_hh'].T, precision=hi)
             + raw['b_ih'] + raw['b_hh'])
    i = jax.nn.sigmoid(gates[:, 0:H])
    f = jax.nn.sigmoid(gates[:, H:2 * H])
    g = jnp.tanh(gates[:, 2 * H:3 * H])
    o = jax.nn.sigmoid(gates[:, 3 * H:4 * H])
    c = f * c0 + i * g
    h = o * jnp.tanh(c)
    act = jnp.dot(h, raw['w_a'].T, precision=hi) + raw['b_a']
    val = jnp.dot(h, raw['w_c'].T, precision=hi) + raw['b_c']
    return act, val


# ---------------- main -----------------------------------------------------------
if __name__ == "__main__":
    key = jax.random.PRNGKey(0)
    pkey, okey = jax.random.split(key)
    raw = init_raw_params(pkey)
    params = fold_params(raw)
    obs = jax.random.normal(okey, (BATCH, IN_CHANNELS, *IMG_HW), jnp.float32)

    act, val = jax.jit(functools.partial(forward, params))(obs)
    jax.block_until_ready((act, val))

    assert act.shape == (BATCH, ACT_DIM), act.shape
    assert val.shape == (BATCH, 1), val.shape
    assert bool(jnp.all(jnp.isfinite(act))) and bool(jnp.all(jnp.isfinite(val)))

    # correctness cross-check against the pure-JAX reference of forward()
    act_ref, val_ref = reference_forward(raw, obs)
    tol = 2e-2 if USE_BF16 else 1e-3
    assert bool(jnp.allclose(act, act_ref, atol=tol, rtol=tol))
    assert bool(jnp.allclose(val, val_ref, atol=tol, rtol=tol))

    print("KERNEL_OK")
</pallas_src>

<mosaic_0001>
module attributes {stable_mosaic.version = 11 : i64} {
  func.func @_fused_forward_kernel(%arg0: i32, %arg1: memref<8x1024xf32, #tpu.memory_space<vmem>>, %arg2: memref<1024x512xf32, #tpu.memory_space<vmem>>, %arg3: memref<1x512xf32, #tpu.memory_space<vmem>>, %arg4: memref<512x256xf32, #tpu.memory_space<vmem>>, %arg5: memref<1x256xf32, #tpu.memory_space<vmem>>, %arg6: memref<256x512xf32, #tpu.memory_space<vmem>>, %arg7: memref<1x512xf32, #tpu.memory_space<vmem>>, %arg8: memref<128x128xf32, #tpu.memory_space<vmem>>, %arg9: memref<1x128xf32, #tpu.memory_space<vmem>>, %arg10: memref<8x128xf32, #tpu.memory_space<vmem>>) attributes {dimension_semantics = [#tpu.dimension_semantics<parallel>], iteration_bounds = array<i64: 1>, scalar_prefetch = 0 : i64, scratch_operands = 0 : i64, tpu.core_type = #tpu.core_type<tc>, window_params = [{transform_indices = @transform_0, window_bounds = array<i64: 8, 1024>}, {pipeline_mode = #tpu.pipeline_mode<synchronous>, transform_indices = @transform_1, window_bounds = array<i64: 1024, 512>}, {pipeline_mode = #tpu.pipeline_mode<synchronous>, transform_indices = @transform_2, window_bounds = array<i64: 1, 512>}, {pipeline_mode = #tpu.pipeline_mode<synchronous>, transform_indices = @transform_3, window_bounds = array<i64: 512, 256>}, {pipeline_mode = #tpu.pipeline_mode<synchronous>, transform_indices = @transform_4, window_bounds = array<i64: 1, 256>}, {pipeline_mode = #tpu.pipeline_mode<synchronous>, transform_indices = @transform_5, window_bounds = array<i64: 256, 512>}, {pipeline_mode = #tpu.pipeline_mode<synchronous>, transform_indices = @transform_6, window_bounds = array<i64: 1, 512>}, {pipeline_mode = #tpu.pipeline_mode<synchronous>, transform_indices = @transform_7, window_bounds = array<i64: 128, 128>}, {pipeline_mode = #tpu.pipeline_mode<synchronous>, transform_indices = @transform_8, window_bounds = array<i64: 1, 128>}, {transform_indices = @transform_9, window_bounds = array<i64: 8, 128>}]} {
    %c0 = arith.constant 0 : index
    %c0_0 = arith.constant 0 : index
    %0 = vector.load %arg1[%c0, %c0_0] : memref<8x1024xf32, #tpu.memory_space<vmem>>, vector<8x1024xf32>
    %c0_1 = arith.constant 0 : index
    %c0_2 = arith.constant 0 : index
    %1 = vector.load %arg2[%c0_1, %c0_2] : memref<1024x512xf32, #tpu.memory_space<vmem>>, vector<1024x512xf32>
    %cst = arith.constant dense<0.000000e+00> : vector<8x512xf32>
    %2 = tpu.matmul %0, %1, %cst {dimension_numbers = #tpu.dot_dimension_numbers<[1], [0], [0], [1], [0, 0, 1, 1], [], []>} : vector<8x1024xf32>, vector<1024x512xf32>, vector<8x512xf32> -> vector<8x512xf32>
    %c0_3 = arith.constant 0 : index
    %c0_4 = arith.constant 0 : index
    %3 = vector.load %arg3[%c0_3, %c0_4] : memref<1x512xf32, #tpu.memory_space<vmem>>, vector<1x512xf32>
    %4 = vector.broadcast %3 : vector<1x512xf32> to vector<8x512xf32>
    %5 = arith.addf %2, %4 : vector<8x512xf32>
    %cst_5 = arith.constant 0.000000e+00 : f32
    %6 = vector.broadcast %cst_5 : f32 to vector<8x512xf32>
    %7 = arith.maximumf %5, %6 : vector<8x512xf32>
    %c0_6 = arith.constant 0 : index
    %c0_7 = arith.constant 0 : index
    %8 = vector.load %arg4[%c0_6, %c0_7] : memref<512x256xf32, #tpu.memory_space<vmem>>, vector<512x256xf32>
    %cst_8 = arith.constant dense<0.000000e+00> : vector<8x256xf32>
    %9 = tpu.matmul %7, %8, %cst_8 {dimension_numbers = #tpu.dot_dimension_numbers<[1], [0], [0], [1], [0, 0, 1, 1], [], []>} : vector<8x512xf32>, vector<512x256xf32>, vector<8x256xf32> -> vector<8x256xf32>
    %c0_9 = arith.constant 0 : index
    %c0_10 = arith.constant 0 : index
    %10 = vector.load %arg5[%c0_9, %c0_10] : memref<1x256xf32, #tpu.memory_space<vmem>>, vector<1x256xf32>
    %11 = vector.broadcast %10 : vector<1x256xf32> to vector<8x256xf32>
    %12 = arith.addf %9, %11 : vector<8x256xf32>
    %cst_11 = arith.constant 0.000000e+00 : f32
    %13 = vector.broadcast %cst_11 : f32 to vector<8x256xf32>
    %14 = arith.maximumf %12, %13 : vector<8x256xf32>
    %c0_12 = arith.constant 0 : index
    %c0_13 = arith.constant 0 : index
    %15 = vector.load %arg6[%c0_12, %c0_13] : memref<256x512xf32, #tpu.memory_space<vmem>>, vector<256x512xf32>
    %cst_14 = arith.constant dense<0.000000e+00> : vector<8x512xf32>
    %16 = tpu.matmul %14, %15, %cst_14 {dimension_numbers = #tpu.dot_dimension_numbers<[1], [0], [0], [1], [0, 0, 1, 1], [], []>} : vector<8x256xf32>, vector<256x512xf32>, vector<8x512xf32> -> vector<8x512xf32>
    %c0_15 = arith.constant 0 : index
    %c0_16 = arith.constant 0 : index
    %17 = vector.load %arg7[%c0_15, %c0_16] : memref<1x512xf32, #tpu.memory_space<vmem>>, vector<1x512xf32>
    %18 = vector.broadcast %17 : vector<1x512xf32> to vector<8x512xf32>
    %19 = arith.addf %16, %18 : vector<8x512xf32>
    %20 = vector.extract_strided_slice %19 {offsets = [0, 0], sizes = [8, 128], strides = [1, 1]} : vector<8x512xf32> to vector<8x128xf32>
    %21 = arith.negf %20 : vector<8x128xf32>
    %22 = math.exp %21 : vector<8x128xf32>
    %cst_17 = arith.constant 1.000000e+00 : f32
    %23 = vector.broadcast %cst_17 : f32 to vector<8x128xf32>
    %24 = arith.addf %23, %22 : vector<8x128xf32>
    %25 = arith.divf %23, %24 : vector<8x128xf32>
    %26 = vector.extract_strided_slice %19 {offsets = [0, 256], sizes = [8, 128], strides = [1, 1]} : vector<8x512xf32> to vector<8x128xf32>
    %27 = math.tanh %26 : vector<8x128xf32>
    %28 = vector.extract_strided_slice %19 {offsets = [0, 384], sizes = [8, 128], strides = [1, 1]} : vector<8x512xf32> to vector<8x128xf32>
    %29 = arith.negf %28 : vector<8x128xf32>
    %30 = math.exp %29 : vector<8x128xf32>
    %cst_18 = arith.constant 1.000000e+00 : f32
    %31 = vector.broadcast %cst_18 : f32 to vector<8x128xf32>
    %32 = arith.addf %31, %30 : vector<8x128xf32>
    %33 = arith.divf %31, %32 : vector<8x128xf32>
    %34 = arith.mulf %25, %27 : vector<8x128xf32>
    %35 = math.tanh %34 : vector<8x128xf32>
    %36 = arith.mulf %33, %35 : vector<8x128xf32>
    %c0_19 = arith.constant 0 : index
    %c0_20 = arith.constant 0 : index
    %37 = vector.load %arg8[%c0_19, %c0_20] : memref<128x128xf32, #tpu.memory_space<vmem>>, vector<128x128xf32>
    %cst_21 = arith.constant dense<0.000000e+00> : vector<8x128xf32>
    %38 = tpu.matmul %36, %37, %cst_21 {dimension_numbers = #tpu.dot_dimension_numbers<[1], [0], [0], [1], [0, 0, 1, 1], [], []>} : vector<8x128xf32>, vector<128x128xf32>, vector<8x128xf32> -> vector<8x128xf32>
    %c0_22 = arith.constant 0 : index
    %c0_23 = arith.constant 0 : index
    %39 = vector.load %arg9[%c0_22, %c0_23] : memref<1x128xf32, #tpu.memory_space<vmem>>, vector<1x128xf32>
    %40 = vector.broadcast %39 : vector<1x128xf32> to vector<8x128xf32>
    %41 = arith.addf %38, %40 : vector<8x128xf32>
    %c0_24 = arith.constant 0 : index
    %c0_25 = arith.constant 0 : index
    %42 = vector.load %arg10[%c0_24, %c0_25] : memref<8x128xf32, #tpu.memory_space<vmem>>, vector<8x128xf32>
    tpu.vector_store %arg10[%c0_24, %c0_25], %41 {strides = array<i32>} : memref<8x128xf32, #tpu.memory_space<vmem>>, vector<8x128xf32>,
    return
  }
  func.func @transform_0(%arg0: i32) -> (i32, i32) {
    %c0_i32 = arith.constant 0 : i32
    %c0_i32_0 = arith.constant 0 : i32
    return %arg0, %c0_i32 : i32, i32
  }
  func.func @transform_1(%arg0: i32) -> (i32, i32) {
    %c0_i32 = arith.constant 0 : i32
    %c0_i32_0 = arith.constant 0 : i32
    %c0_i32_1 = arith.constant 0 : i32
    return %c0_i32, %c0_i32_0 : i32, i32
  }
  func.func @transform_2(%arg0: i32) -> (i32, i32) {
    %c0_i32 = arith.constant 0 : i32
    %c0_i32_0 = arith.constant 0 : i32
    %c0_i32_1 = arith.constant 0 : i32
    return %c0_i32, %c0_i32_0 : i32, i32
  }
  func.func @transform_3(%arg0: i32) -> (i32, i32) {
    %c0_i32 = arith.constant 0 : i32
    %c0_i32_0 = arith.constant 0 : i32
    %c0_i32_1 = arith.constant 0 : i32
    return %c0_i32, %c0_i32_0 : i32, i32
  }
  func.func @transform_4(%arg0: i32) -> (i32, i32) {
    %c0_i32 = arith.constant 0 : i32
    %c0_i32_0 = arith.constant 0 : i32
    %c0_i32_1 = arith.constant 0 : i32
    return %c0_i32, %c0_i32_0 : i32, i32
  }
  func.func @transform_5(%arg0: i32) -> (i32, i32) {
    %c0_i32 = arith.constant 0 : i32
    %c0_i32_0 = arith.constant 0 : i32
    %c0_i32_1 = arith.constant 0 : i32
    return %c0_i32, %c0_i32_0 : i32, i32
  }
  func.func @transform_6(%arg0: i32) -> (i32, i32) {
    %c0_i32 = arith.constant 0 : i32
    %c0_i32_0 = arith.constant 0 : i32
    %c0_i32_1 = arith.constant 0 : i32
    return %c0_i32, %c0_i32_0 : i32, i32
  }
  func.func @transform_7(%arg0: i32) -> (i32, i32) {
    %c0_i32 = arith.constant 0 : i32
    %c0_i32_0 = arith.constant 0 : i32
    %c0_i32_1 = arith.constant 0 : i32
    return %c0_i32, %c0_i32_0 : i32, i32
  }
  func.func @transform_8(%arg0: i32) -> (i32, i32) {
    %c0_i32 = arith.constant 0 : i32
    %c0_i32_0 = arith.constant 0 : i32
    %c0_i32_1 = arith.constant 0 : i32
    return %c0_i32, %c0_i32_0 : i32, i32
  }
  func.func @transform_9(%arg0: i32) -> (i32, i32) {
    %c0_i32 = arith.constant 0 : i32
    %c0_i32_0 = arith.constant 0 : i32
    return %arg0, %c0_i32 : i32, i32
  }
}

</mosaic_0001>

<llo_original>
// kernel: forward.1
$region0: #{forward.1}
  #allocation0 [shape = 'u32[]', space=smem, size = 0x4, offset = 0x4, fixed_abs, tag = 'smem constant byte address 0x4 - core index']
  #allocation1 [shape = 'u32[144,128]{1,0:T(1,128)}', space=vmem, size = 0x12000, scoped, tag = 'internal scratch']
  %s0 = inlined_call_operand.vmem [shape: f32[8,1024], index: 0, kind: input, shape index: {}]
  %s1 = inlined_call_operand.hbm [shape: f32[1024,512], index: 1, kind: input, shape index: {}]
  %s2 = inlined_call_operand.hbm [shape: f32[1,512], index: 2, kind: input, shape index: {}]
  %s3 = inlined_call_operand.hbm [shape: f32[512,256], index: 3, kind: input, shape index: {}]
  %s4 = inlined_call_operand.hbm [shape: f32[1,256], index: 4, kind: input, shape index: {}]
  %s5 = inlined_call_operand.hbm [shape: f32[256,512], index: 5, kind: input, shape index: {}]
  %s6 = inlined_call_operand.hbm [shape: f32[1,512], index: 6, kind: input, shape index: {}]
  %s7 = inlined_call_operand.hbm [shape: f32[128,128], index: 7, kind: input, shape index: {}]
  %s8 = inlined_call_operand.hbm [shape: f32[1,128], index: 8, kind: input, shape index: {}]
  %s9 = inlined_call_operand.vmem [shape: f32[8,128], index: 9, kind: output, shape index: {}]
  %s10 = sld [smem:[#allocation0]]
  $region78: #{forward.1} parent=0
    _
  %s12 = ssub.s32 1, %s10
  %s13 = scalar_select 0, %s12, %s10
  $region1: #{forward.1} parent=0
    #allocation2 [shape = 'u8[2097152]{0}', space=vmem, size = 0x200000, scoped, tag = 'input window, operand 1, single buffered']
    #allocation3 [shape = 's32[1]{0}', space=sflag, size = 0x4, scoped, tag = 'scoped memory for forward.1']
    #allocation4 [shape = 'u8[2048]{0}', space=vmem, size = 0x800, scoped, tag = 'input window, operand 2, single buffered']
    #allocation5 [shape = 's32[1]{0}', space=sflag, size = 0x4, scoped, tag = 'scoped memory for forward.1']
    #allocation6 [shape = 'u8[524288]{0}', space=vmem, size = 0x80000, scoped, tag = 'input window, operand 3, single buffered']
    #allocation7 [shape = 'u8[1024]{0}', space=vmem, size = 0x400, scoped, tag = 'input window, operand 4, single buffered']
    #allocation8 [shape = 's32[1]{0}', space=sflag, size = 0x4, scoped, tag = 'scoped memory for forward.1']
    #allocation9 [shape = 'u8[524288]{0}', space=vmem, size = 0x80000, scoped, tag = 'input window, operand 5, single buffered']
    #allocation10 [shape = 'u8[2048]{0}', space=vmem, size = 0x800, scoped, tag = 'input window, operand 6, single buffered']
    #allocation11 [shape = 's32[1]{0}', space=sflag, size = 0x4, scoped, tag = 'scoped memory for forward.1']
    #allocation12 [shape = 'u8[65536]{0}', space=vmem, size = 0x10000, scoped, tag = 'input window, operand 7, single buffered']
    #allocation13 [shape = 'u8[512]{0}', space=vmem, size = 0x400, scoped, tag = 'input window, operand 8, single buffered']
    #allocation14 [shape = 's32[1]{0}', space=sflag, size = 0x4, scoped, tag = 'scoped memory for forward.1']
    %14 = vsyncpa [#allocation3], 0
    %15 = vsyncpa [#allocation5], 0
    %16 = vsyncpa [#allocation8], 0
    %17 = vsyncpa [#allocation11], 0
    %18 = vsyncpa [#allocation14], 0
    // Predicated region
    $region2: #{forward.1} parent=1 // pred_check
      _
    $region3: #{forward.1} parent=1 // pred_check_branch
      %20 = sbr.rel (0) target = $region5
    $region4: #{forward.1} parent=1 // pred_region
      _
    $region5: #{forward.1} parent=1 // pred_fallthru
      _
    // Predicated region
    $region6: #{forward.1} parent=1 // pred_check
      _
    $region7: #{forward.1} parent=1 // pred_check_branch
      %22 = sbr.rel (0) target = $region9
    $region8: #{forward.1} parent=1 // pred_region
      %s24 = ssub.s32 65536, 65536
      %25 = vsyncadd [#allocation3], %s24
      %s26 = sshll.u32 [#allocation2], 4
      %s27 = int_to_ptr.vmem [resolvable:$true] %s26
      %32 = dma.hbm_to_vmem [thread:$0]  %s1, 65536, %s27, [#allocation3], 512, 512, 32
    $region9: #{forward.1} parent=1 // pred_fallthru
      _
    // Predicated region
    $region10: #{forward.1} parent=1 // pred_check
      _
    $region11: #{forward.1} parent=1 // pred_check_branch
      %34 = sbr.rel (0) target = $region13
    $region12: #{forward.1} parent=1 // pred_region
      %s36 = ssub.s32 64, 64
      %37 = vsyncadd [#allocation5], %s36
      %s39 = sshll.u32 [#allocation4], 4
      %s40 = int_to_ptr.vmem [resolvable:$true] %s39
      %42 = dma.hbm_to_vmem [thread:$0]  %s2, 64, %s40, [#allocation5]
    $region13: #{forward.1} parent=1 // pred_fallthru
      _
    // Predicated region
    $region14: #{forward.1} parent=1 // pred_check
      _
    $region15: #{forward.1} parent=1 // pred_check_branch
      %44 = sbr.rel (0) target = $region17
    $region16: #{forward.1} parent=1 // pred_region
      %s46 = ssub.s32 16384, 16384
      %47 = vsyncadd [#allocation5], %s46
      %s48 = sshll.u32 [#allocation6], 4
      %s49 = int_to_ptr.vmem [resolvable:$true] %s48
      %54 = dma.hbm_to_vmem [thread:$0]  %s3, 16384, %s49, [#allocation5], 256, 256, 16
    $region17: #{forward.1} parent=1 // pred_fallthru
      _
    // Predicated region
    $region18: #{forward.1} parent=1 // pred_check
      _
    $region19: #{forward.1} parent=1 // pred_check_branch
      %56 = sbr.rel (0) target = $region21
    $region20: #{forward.1} parent=1 // pred_region
      %s58 = ssub.s32 32, 32
      %59 = vsyncadd [#allocation8], %s58
      %s61 = sshll.u32 [#allocation7], 4
      %s62 = int_to_ptr.vmem [resolvable:$true] %s61
      %64 = dma.hbm_to_vmem [thread:$0]  %s4, 32, %s62, [#allocation8]
    $region21: #{forward.1} parent=1 // pred_fallthru
      _
    // Predicated region
    $region22: #{forward.1} parent=1 // pred_check
      _
    $region23: #{forward.1} parent=1 // pred_check_branch
      %66 = sbr.rel (0) target = $region25
    $region24: #{forward.1} parent=1 // pred_region
      %s68 = ssub.s32 16384, 16384
      %69 = vsyncadd [#allocation8], %s68
      %s70 = sshll.u32 [#allocation9], 4
      %s71 = int_to_ptr.vmem [resolvable:$true] %s70
      %76 = dma.hbm_to_vmem [thread:$0]  %s5, 16384, %s71, [#allocation8], 512, 512, 32
    $region25: #{forward.1} parent=1 // pred_fallthru
      _
    // Predicated region
    $region26: #{forward.1} parent=1 // pred_check
      _
    $region27: #{forward.1} parent=1 // pred_check_branch
      %78 = sbr.rel (0) target = $region29
    $region28: #{forward.1} parent=1 // pred_region
      %s80 = ssub.s32 64, 64
      %81 = vsyncadd [#allocation11], %s80
      %s83 = sshll.u32 [#allocation10], 4
      %s84 = int_to_ptr.vmem [resolvable:$true] %s83
      %86 = dma.hbm_to_vmem [thread:$0]  %s6, 64, %s84, [#allocation11]
    $region29: #{forward.1} parent=1 // pred_fallthru
      _
    // Predicated region
    $region30: #{forward.1} parent=1 // pred_check
      _
    $region31: #{forward.1} parent=1 // pred_check_branch
      %88 = sbr.rel (0) target = $region33
    $region32: #{forward.1} parent=1 // pred_region
      %s90 = ssub.s32 2048, 2048
      %91 = vsyncadd [#allocation11], %s90
      %s92 = sshll.u32 [#allocation12], 4
      %s93 = int_to_ptr.vmem [resolvable:$true] %s92
      %98 = dma.hbm_to_vmem [thread:$0]  %s7, 2048, %s93, [#allocation11], 128, 128, 8
    $region33: #{forward.1} parent=1 // pred_fallthru
      _
    // Predicated region
    $region34: #{forward.1} parent=1 // pred_check
      _
    $region35: #{forward.1} parent=1 // pred_check_branch
      %100 = sbr.rel (0) target = $region37
    $region36: #{forward.1} parent=1 // pred_region
      %s102 = ssub.s32 16, 16
      %103 = vsyncadd [#allocation14], %s102
      %s105 = sshll.u32 [#allocation13], 4
      %s106 = int_to_ptr.vmem [resolvable:$true] %s105
      %108 = dma.hbm_to_vmem [thread:$0]  %s8, 16, %s106, [#allocation14]
    $region37: #{forward.1} parent=1 // pred_fallthru
      _
    // Predicated region
    $region38: #{forward.1} parent=1 // pred_check
      _
    $region39: #{forward.1} parent=1 // pred_check_branch
      %110 = sbr.rel (0) target = $region41
    $region40: #{forward.1} parent=1 // pred_region
      %111 = dma.done [#allocation3], 65536
    $region41: #{forward.1} parent=1 // pred_fallthru
      _
    // Predicated region
    $region42: #{forward.1} parent=1 // pred_check
      _
    $region43: #{forward.1} parent=1 // pred_check_branch
      %113 = sbr.rel (0) target = $region45
    $region44: #{forward.1} parent=1 // pred_region
      %114 = dma.done [#allocation5], 64
    $region45: #{forward.1} parent=1 // pred_fallthru
      _
    // Predicated region
    $region46: #{forward.1} parent=1 // pred_check
      _
    $region47: #{forward.1} parent=1 // pred_check_branch
      %116 = sbr.rel (0) target = $region49
    $region48: #{forward.1} parent=1 // pred_region
      %117 = dma.done [#allocation5], 16384
    $region49: #{forward.1} parent=1 // pred_fallthru
      _
    // Predicated region
    $region50: #{forward.1} parent=1 // pred_check
      _
    $region51: #{forward.1} parent=1 // pred_check_branch
      %119 = sbr.rel (0) target = $region53
    $region52: #{forward.1} parent=1 // pred_region
      %120 = dma.done [#allocation8], 32
    $region53: #{forward.1} parent=1 // pred_fallthru
      _
    // Predicated region
    $region54: #{forward.1} parent=1 // pred_check
      _
    $region55: #{forward.1} parent=1 // pred_check_branch
      %122 = sbr.rel (0) target = $region57
    $region56: #{forward.1} parent=1 // pred_region
      %123 = dma.done [#allocation8], 16384
    $region57: #{forward.1} parent=1 // pred_fallthru
      _
    // Predicated region
    $region58: #{forward.1} parent=1 // pred_check
      _
    $region59: #{forward.1} parent=1 // pred_check_branch
      %125 = sbr.rel (0) target = $region61
    $region60: #{forward.1} parent=1 // pred_region
      %126 = dma.done [#allocation11], 64
    $region61: #{forward.1} parent=1 // pred_fallthru
      _
    // Predicated region
    $region62: #{forward.1} parent=1 // pred_check
      _
    $region63: #{forward.1} parent=1 // pred_check_branch
      %128 = sbr.rel (0) target = $region65
    $region64: #{forward.1} parent=1 // pred_region
      %129 = dma.done [#allocation11], 2048
    $region65: #{forward.1} parent=1 // pred_fallthru
      _
    // Predicated region
    $region66: #{forward.1} parent=1 // pred_check
      _
    $region67: #{forward.1} parent=1 // pred_check_branch
      %131 = sbr.rel (0) target = $region69
    $region68: #{forward.1} parent=1 // pred_region
      %132 = dma.done [#allocation14], 16
    $region69: #{forward.1} parent=1 // pred_fallthru
      _
    %v133 = vld [vmem:[%s0] sm:$0xff]
    %v134 = vld [vmem:[%s0 + $0x8] sm:$0xff]
    %v135 = vld [vmem:[%s0 + $0x10] sm:$0xff]
    %v136 = vld [vmem:[%s0 + $0x18] sm:$0xff]
    %v137 = vld [vmem:[%s0 + $0x20] sm:$0xff]
    %v138 = vld [vmem:[%s0 + $0x28] sm:$0xff]
    %v139 = vld [vmem:[%s0 + $0x30] sm:$0xff]
    %v140 = vld [vmem:[%s0 + $0x38] sm:$0xff]
    %v141 = vld [vmem:[#allocation2] sm:$0xff]
    %v142 = vld [vmem:[#allocation2 + $0x8] sm:$0xff]
    %v143 = vld [vmem:[#allocation2 + $0x10] sm:$0xff]
    %v144 = vld [vmem:[#allocation2 + $0x18] sm:$0xff]
    %v145 = vld [vmem:[#allocation2 + $0x20] sm:$0xff]
    %v146 = vld [vmem:[#allocation2 + $0x28] sm:$0xff]
    %v147 = vld [vmem:[#allocation2 + $0x30] sm:$0xff]
    %v148 = vld [vmem:[#allocation2 + $0x38] sm:$0xff]
    %v149 = vld [vmem:[#allocation2 + $0x40] sm:$0xff]
    %v150 = vld [vmem:[#allocation2 + $0x48] sm:$0xff]
    %v151 = vld [vmem:[#allocation2 + $0x50] sm:$0xff]
    %v152 = vld [vmem:[#allocation2 + $0x58] sm:$0xff]
    %v153 = vld [vmem:[#allocation2 + $0x60] sm:$0xff]
    %v154 = vld [vmem:[#allocation2 + $0x68] sm:$0xff]
    %v155 = vld [vmem:[#allocation2 + $0x70] sm:$0xff]
    %v156 = vld [vmem:[#allocation2 + $0x78] sm:$0xff]
    %v157 = vld [vmem:[#allocation2 + $0x80] sm:$0xff]
    %v158 = vld [vmem:[#allocation2 + $0x88] sm:$0xff]
    %v159 = vld [vmem:[#allocation2 + $0x90] sm:$0xff]
    %v160 = vld [vmem:[#allocation2 + $0x98] sm:$0xff]
    %v161 = vld [vmem:[#allocation2 + $0xa0] sm:$0xff]
    %v162 = vld [vmem:[#allocation2 + $0xa8] sm:$0xff]
    %v163 = vld [vmem:[#allocation2 + $0xb0] sm:$0xff]
    %v164 = vld [vmem:[#allocation2 + $0xb8] sm:$0xff]
    %v165 = vld [vmem:[#allocation2 + $0xc0] sm:$0xff]
    %v166 = vld [vmem:[#allocation2 + $0xc8] sm:$0xff]
    %v167 = vld [vmem:[#allocation2 + $0xd0] sm:$0xff]
    %v168 = vld [vmem:[#allocation2 + $0xd8] sm:$0xff]
    %v169 = vld [vmem:[#allocation2 + $0xe0] sm:$0xff]
    %v170 = vld [vmem:[#allocation2 + $0xe8] sm:$0xff]
    %v171 = vld [vmem:[#allocation2 + $0xf0] sm:$0xff]
    %v172 = vld [vmem:[#allocation2 + $0xf8] sm:$0xff]
    %v173 = vld [vmem:[#allocation2 + $0x100] sm:$0xff]
    %v174 = vld [vmem:[#allocation2 + $0x108] sm:$0xff]
    %v175 = vld [vmem:[#allocation2 + $0x110] sm:$0xff]
    %v176 = vld [vmem:[#allocation2 + $0x118] sm:$0xff]
    %v177 = vld [vmem:[#allocation2 + $0x120] sm:$0xff]
    %v178 = vld [vmem:[#allocation2 + $0x128] sm:$0xff]
    %v179 = vld [vmem:[#allocation2 + $0x130] sm:$0xff]
    %v180 = vld [vmem:[#allocation2 + $0x138] sm:$0xff]
    %v181 = vld [vmem:[#allocation2 + $0x140] sm:$0xff]
    %v182 = vld [vmem:[#allocation2 + $0x148] sm:$0xff]
    %v183 = vld [vmem:[#allocation2 + $0x150] sm:$0xff]
    %v184 = vld [vmem:[#allocation2 + $0x158] sm:$0xff]
    %v185 = vld [vmem:[#allocation2 + $0x160] sm:$0xff]
    %v186 = vld [vmem:[#allocation2 + $0x168] sm:$0xff]
    %v187 = vld [vmem:[#allocation2 + $0x170] sm:$0xff]
    %v188 = vld [vmem:[#allocation2 + $0x178] sm:$0xff]
    %v189 = vld [vmem:[#allocation2 + $0x180] sm:$0xff]
    %v190 = vld [vmem:[#allocation2 + $0x188] sm:$0xff]
    %v191 = vld [vmem:[#allocation2 + $0x190] sm:$0xff]
    %v192 = vld [vmem:[#allocation2 + $0x198] sm:$0xff]
    %v193 = vld [vmem:[#allocation2 + $0x1a0] sm:$0xff]
    %v194 = vld [vmem:[#allocation2 + $0x1a8] sm:$0xff]
    %v195 = vld [vmem:[#allocation2 + $0x1b0] sm:$0xff]
    %v196 = vld [vmem:[#allocation2 + $0x1b8] sm:$0xff]
    %v197 = vld [vmem:[#allocation2 + $0x1c0] sm:$0xff]
    %v198 = vld [vmem:[#allocation2 + $0x1c8] sm:$0xff]
    %v199 = vld [vmem:[#allocation2 + $0x1d0] sm:$0xff]
    %v200 = vld [vmem:[#allocation2 + $0x1d8] sm:$0xff]
    %v201 = vld [vmem:[#allocation2 + $0x1e0] sm:$0xff]
    %v202 = vld [vmem:[#allocation2 + $0x1e8] sm:$0xff]
    %v203 = vld [vmem:[#allocation2 + $0x1f0] sm:$0xff]
    %v204 = vld [vmem:[#allocation2 + $0x1f8] sm:$0xff]
    %v205 = vld [vmem:[#allocation2 + $0x200] sm:$0xff]
    %v206 = vld [vmem:[#allocation2 + $0x208] sm:$0xff]
    %v207 = vld [vmem:[#allocation2 + $0x210] sm:$0xff]
    %v208 = vld [vmem:[#allocation2 + $0x218] sm:$0xff]
    %v209 = vld [vmem:[#allocation2 + $0x220] sm:$0xff]
    %v210 = vld [vmem:[#allocation2 + $0x228] sm:$0xff]
    %v211 = vld [vmem:[#allocation2 + $0x230] sm:$0xff]
    %v212 = vld [vmem:[#allocation2 + $0x238] sm:$0xff]
    %v213 = vld [vmem:[#allocation2 + $0x240] sm:$0xff]
    %v214 = vld [vmem:[#allocation2 + $0x248] sm:$0xff]
    %v215 = vld [vmem:[#allocation2 + $0x250] sm:$0xff]
    %v216 = vld [vmem:[#allocation2 + $0x258] sm:$0xff]
    %v217 = vld [vmem:[#allocation2 + $0x260] sm:$0xff]
    %v218 = vld [vmem:[#allocation2 + $0x268] sm:$0xff]
    %v219 = vld [vmem:[#allocation2 + $0x270] sm:$0xff]
    %v220 = vld [vmem:[#allocation2 + $0x278] sm:$0xff]
    %v221 = vld [vmem:[#allocation2 + $0x280] sm:$0xff]
    %v222 = vld [vmem:[#allocation2 + $0x288] sm:$0xff]
    %v223 = vld [vmem:[#allocation2 + $0x290] sm:$0xff]
    %v224 = vld [vmem:[#allocation2 + $0x298] sm:$0xff]
    %v225 = vld [vmem:[#allocation2 + $0x2a0] sm:$0xff]
    %v226 = vld [vmem:[#allocation2 + $0x2a8] sm:$0xff]
    %v227 = vld [vmem:[#allocation2 + $0x2b0] sm:$0xff]
    %v228 = vld [vmem:[#allocation2 + $0x2b8] sm:$0xff]
    %v229 = vld [vmem:[#allocation2 + $0x2c0] sm:$0xff]
    %v230 = vld [vmem:[#allocation2 + $0x2c8] sm:$0xff]
    %v231 = vld [vmem:[#allocation2 + $0x2d0] sm:$0xff]
    %v232 = vld [vmem:[#allocation2 + $0x2d8] sm:$0xff]
    %v233 = vld [vmem:[#allocation2 + $0x2e0] sm:$0xff]
    %v234 = vld [vmem:[#allocation2 + $0x2e8] sm:$0xff]
    %v235 = vld [vmem:[#allocation2 + $0x2f0] sm:$0xff]
    %v236 = vld [vmem:[#allocation2 + $0x2f8] sm:$0xff]
    %v237 = vld [vmem:[#allocation2 + $0x300] sm:$0xff]
    %v238 = vld [vmem:[#allocation2 + $0x308] sm:$0xff]
    %v239 = vld [vmem:[#allocation2 + $0x310] sm:$0xff]
    %v240 = vld [vmem:[#allocation2 + $0x318] sm:$0xff]
    %v241 = vld [vmem:[#allocation2 + $0x320] sm:$0xff]
    %v242 = vld [vmem:[#allocation2 + $0x328] sm:$0xff]
    %v243 = vld [vmem:[#allocation2 + $0x330] sm:$0xff]
    %v244 = vld [vmem:[#allocation2 + $0x338] sm:$0xff]
    %v245 = vld [vmem:[#allocation2 + $0x340] sm:$0xff]
    %v246 = vld [vmem:[#allocation2 + $0x348] sm:$0xff]
    %v247 = vld [vmem:[#allocation2 + $0x350] sm:$0xff]
    %v248 = vld [vmem:[#allocation2 + $0x358] sm:$0xff]
    %v249 = vld [vmem:[#allocation2 + $0x360] sm:$0xff]
    %v250 = vld [vmem:[#allocation2 + $0x368] sm:$0xff]
    %v251 = vld [vmem:[#allocation2 + $0x370] sm:$0xff]
    %v252 = vld [vmem:[#allocation2 + $0x378] sm:$0xff]
    %v253 = vld [vmem:[#allocation2 + $0x380] sm:$0xff]
    %v254 = vld [vmem:[#allocation2 + $0x388] sm:$0xff]
    %v255 = vld [vmem:[#allocation2 + $0x390] sm:$0xff]
    %v256 = vld [vmem:[#allocation2 + $0x398] sm:$0xff]
    %v257 = vld [vmem:[#allocation2 + $0x3a0] sm:$0xff]
    %v258 = vld [vmem:[#allocation2 + $0x3a8] sm:$0xff]
    %v259 = vld [vmem:[#allocation2 + $0x3b0] sm:$0xff]
    %v260 = vld [vmem:[#allocation2 + $0x3b8] sm:$0xff]
    %v261 = vld [vmem:[#allocation2 + $0x3c0] sm:$0xff]
    %v262 = vld [vmem:[#allocation2 + $0x3c8] sm:$0xff]
    %v263 = vld [vmem:[#allocation2 + $0x3d0] sm:$0xff]
    %v264 = vld [vmem:[#allocation2 + $0x3d8] sm:$0xff]
    %v265 = vld [vmem:[#allocation2 + $0x3e0] sm:$0xff]
    %v266 = vld [vmem:[#allocation2 + $0x3e8] sm:$0xff]
    %v267 = vld [vmem:[#allocation2 + $0x3f0] sm:$0xff]
    %v268 = vld [vmem:[#allocation2 + $0x3f8] sm:$0xff]
    %v269 = vld [vmem:[#allocation2 + $0x400] sm:$0xff]
    %v270 = vld [vmem:[#allocation2 + $0x408] sm:$0xff]
    %v271 = vld [vmem:[#allocation2 + $0x410] sm:$0xff]
    %v272 = vld [vmem:[#allocation2 + $0x418] sm:$0xff]
    %v273 = vld [vmem:[#allocation2 + $0x420] sm:$0xff]
    %v274 = vld [vmem:[#allocation2 + $0x428] sm:$0xff]
    %v275 = vld [vmem:[#allocation2 + $0x430] sm:$0xff]
    %v276 = vld [vmem:[#allocation2 + $0x438] sm:$0xff]
    %v277 = vld [vmem:[#allocation2 + $0x440] sm:$0xff]
    %v278 = vld [vmem:[#allocation2 + $0x448] sm:$0xff]
    %v279 = vld [vmem:[#allocation2 + $0x450] sm:$0xff]
    %v280 = vld [vmem:[#allocation2 + $0x458] sm:$0xff]
    %v281 = vld [vmem:[#allocation2 + $0x460] sm:$0xff]
    %v282 = vld [vmem:[#allocation2 + $0x468] sm:$0xff]
    %v283 = vld [vmem:[#allocation2 + $0x470] sm:$0xff]
    %v284 = vld [vmem:[#allocation2 + $0x478] sm:$0xff]
    %v285 = vld [vmem:[#allocation2 + $0x480] sm:$0xff]
    %v286 = vld [vmem:[#allocation2 + $0x488] sm:$0xff]
    %v287 = vld [vmem:[#allocation2 + $0x490] sm:$0xff]
    %v288 = vld [vmem:[#allocation2 + $0x498] sm:$0xff]
    %v289 = vld [vmem:[#allocation2 + $0x4a0] sm:$0xff]
    %v290 = vld [vmem:[#allocation2 + $0x4a8] sm:$0xff]
    %v291 = vld [vmem:[#allocation2 + $0x4b0] sm:$0xff]
    %v292 = vld [vmem:[#allocation2 + $0x4b8] sm:$0xff]
    %v293 = vld [vmem:[#allocation2 + $0x4c0] sm:$0xff]
    %v294 = vld [vmem:[#allocation2 + $0x4c8] sm:$0xff]
    %v295 = vld [vmem:[#allocation2 + $0x4d0] sm:$0xff]
    %v296 = vld [vmem:[#allocation2 + $0x4d8] sm:$0xff]
    %v297 = vld [vmem:[#allocation2 + $0x4e0] sm:$0xff]
    %v298 = vld [vmem:[#allocation2 + $0x4e8] sm:$0xff]
    %v299 = vld [vmem:[#allocation2 + $0x4f0] sm:$0xff]
    %v300 = vld [vmem:[#allocation2 + $0x4f8] sm:$0xff]
    %v301 = vld [vmem:[#allocation2 + $0x500] sm:$0xff]
    %v302 = vld [vmem:[#allocation2 + $0x508] sm:$0xff]
    %v303 = vld [vmem:[#allocation2 + $0x510] sm:$0xff]
    %v304 = vld [vmem:[#allocation2 + $0x518] sm:$0xff]
    %v305 = vld [vmem:[#allocation2 + $0x520] sm:$0xff]
    %v306 = vld [vmem:[#allocation2 + $0x528] sm:$0xff]
    %v307 = vld [vmem:[#allocation2 + $0x530] sm:$0xff]
    %v308 = vld [vmem:[#allocation2 + $0x538] sm:$0xff]
    %v309 = vld [vmem:[#allocation2 + $0x540] sm:$0xff]
    %v310 = vld [vmem:[#allocation2 + $0x548] sm:$0xff]
    %v311 = vld [vmem:[#allocation2 + $0x550] sm:$0xff]
    %v312 = vld [vmem:[#allocation2 + $0x558] sm:$0xff]
    %v313 = vld [vmem:[#allocation2 + $0x560] sm:$0xff]
    %v314 = vld [vmem:[#allocation2 + $0x568] sm:$0xff]
    %v315 = vld [vmem:[#allocation2 + $0x570] sm:$0xff]
    %v316 = vld [vmem:[#allocation2 + $0x578] sm:$0xff]
    %v317 = vld [vmem:[#allocation2 + $0x580] sm:$0xff]
    %v318 = vld [vmem:[#allocation2 + $0x588] sm:$0xff]
    %v319 = vld [vmem:[#allocation2 + $0x590] sm:$0xff]
    %v320 = vld [vmem:[#allocation2 + $0x598] sm:$0xff]
    %v321 = vld [vmem:[#allocation2 + $0x5a0] sm:$0xff]
    %v322 = vld [vmem:[#allocation2 + $0x5a8] sm:$0xff]
    %v323 = vld [vmem:[#allocation2 + $0x5b0] sm:$0xff]
    %v324 = vld [vmem:[#allocation2 + $0x5b8] sm:$0xff]
    %v325 = vld [vmem:[#allocation2 + $0x5c0] sm:$0xff]
    %v326 = vld [vmem:[#allocation2 + $0x5c8] sm:$0xff]
    %v327 = vld [vmem:[#allocation2 + $0x5d0] sm:$0xff]
    %v328 = vld [vmem:[#allocation2 + $0x5d8] sm:$0xff]
    %v329 = vld [vmem:[#allocation2 + $0x5e0] sm:$0xff]
    %v330 = vld [vmem:[#allocation2 + $0x5e8] sm:$0xff]
    %v331 = vld [vmem:[#allocation2 + $0x5f0] sm:$0xff]
    %v332 = vld [vmem:[#allocation2 + $0x5f8] sm:$0xff]
    %v333 = vld [vmem:[#allocation2 + $0x600] sm:$0xff]
    %v334 = vld [vmem:[#allocation2 + $0x608] sm:$0xff]
    %v335 = vld [vmem:[#allocation2 + $0x610] sm:$0xff]
    %v336 = vld [vmem:[#allocation2 + $0x618] sm:$0xff]
    %v337 = vld [vmem:[#allocation2 + $0x620] sm:$0xff]
    %v338 = vld [vmem:[#allocation2 + $0x628] sm:$0xff]
    %v339 = vld [vmem:[#allocation2 + $0x630] sm:$0xff]
    %v340 = vld [vmem:[#allocation2 + $0x638] sm:$0xff]
    %v341 = vld [vmem:[#allocation2 + $0x640] sm:$0xff]
    %v342 = vld [vmem:[#allocation2 + $0x648] sm:$0xff]
    %v343 = vld [vmem:[#allocation2 + $0x650] sm:$0xff]
    %v344 = vld [vmem:[#allocation2 + $0x658] sm:$0xff]
    %v345 = vld [vmem:[#allocation2 + $0x660] sm:$0xff]
    %v346 = vld [vmem:[#allocation2 + $0x668] sm:$0xff]
    %v347 = vld [vmem:[#allocation2 + $0x670] sm:$0xff]
    %v348 = vld [vmem:[#allocation2 + $0x678] sm:$0xff]
    %v349 = vld [vmem:[#allocation2 + $0x680] sm:$0xff]
    %v350 = vld [vmem:[#allocation2 + $0x688] sm:$0xff]
    %v351 = vld [vmem:[#allocation2 + $0x690] sm:$0xff]
    %v352 = vld [vmem:[#allocation2 + $0x698] sm:$0xff]
    %v353 = vld [vmem:[#allocation2 + $0x6a0] sm:$0xff]
    %v354 = vld [vmem:[#allocation2 + $0x6a8] sm:$0xff]
    %v355 = vld [vmem:[#allocation2 + $0x6b0] sm:$0xff]
    %v356 = vld [vmem:[#allocation2 + $0x6b8] sm:$0xff]
    %v357 = vld [vmem:[#allocation2 + $0x6c0] sm:$0xff]
    %v358 = vld [vmem:[#allocation2 + $0x6c8] sm:$0xff]
    %v359 = vld [vmem:[#allocation2 + $0x6d0] sm:$0xff]
    %v360 = vld [vmem:[#allocation2 + $0x6d8] sm:$0xff]
    %v361 = vld [vmem:[#allocation2 + $0x6e0] sm:$0xff]
    %v362 = vld [vmem:[#allocation2 + $0x6e8] sm:$0xff]
    %v363 = vld [vmem:[#allocation2 + $0x6f0] sm:$0xff]
    %v364 = vld [vmem:[#allocation2 + $0x6f8] sm:$0xff]
    %v365 = vld [vmem:[#allocation2 + $0x700] sm:$0xff]
    %v366 = vld [vmem:[#allocation2 + $0x708] sm:$0xff]
    %v367 = vld [vmem:[#allocation2 + $0x710] sm:$0xff]
    %v368 = vld [vmem:[#allocation2 + $0x718] sm:$0xff]
    %v369 = vld [vmem:[#allocation2 + $0x720] sm:$0xff]
    %v370 = vld [vmem:[#allocation2 + $0x728] sm:$0xff]
    %v371 = vld [vmem:[#allocation2 + $0x730] sm:$0xff]
    %v372 = vld [vmem:[#allocation2 + $0x738] sm:$0xff]
    %v373 = vld [vmem:[#allocation2 + $0x740] sm:$0xff]
    %v374 = vld [vmem:[#allocation2 + $0x748] sm:$0xff]
    %v375 = vld [vmem:[#allocation2 + $0x750] sm:$0xff]
    %v376 = vld [vmem:[#allocation2 + $0x758] sm:$0xff]
    %v377 = vld [vmem:[#allocation2 + $0x760] sm:$0xff]
    %v378 = vld [vmem:[#allocation2 + $0x768] sm:$0xff]
    %v379 = vld [vmem:[#allocation2 + $0x770] sm:$0xff]
    %v380 = vld [vmem:[#allocation2 + $0x778] sm:$0xff]
    %v381 = vld [vmem:[#allocation2 + $0x780] sm:$0xff]
    %v382 = vld [vmem:[#allocation2 + $0x788] sm:$0xff]
    %v383 = vld [vmem:[#allocation2 + $0x790] sm:$0xff]
    %v384 = vld [vmem:[#allocation2 + $0x798] sm:$0xff]
    %v385 = vld [vmem:[#allocation2 + $0x7a0] sm:$0xff]
    %v386 = vld [vmem:[#allocation2 + $0x7a8] sm:$0xff]
    %v387 = vld [vmem:[#allocation2 + $0x7b0] sm:$0xff]
    %v388 = vld [vmem:[#allocation2 + $0x7b8] sm:$0xff]
    %v389 = vld [vmem:[#allocation2 + $0x7c0] sm:$0xff]
    %v390 = vld [vmem:[#allocation2 + $0x7c8] sm:$0xff]
    %v391 = vld [vmem:[#allocation2 + $0x7d0] sm:$0xff]
    %v392 = vld [vmem:[#allocation2 + $0x7d8] sm:$0xff]
    %v393 = vld [vmem:[#allocation2 + $0x7e0] sm:$0xff]
    %v394 = vld [vmem:[#allocation2 + $0x7e8] sm:$0xff]
    %v395 = vld [vmem:[#allocation2 + $0x7f0] sm:$0xff]
    %v396 = vld [vmem:[#allocation2 + $0x7f8] sm:$0xff]
    %v397 = vld [vmem:[#allocation2 + $0x800] sm:$0xff]
    %v398 = vld [vmem:[#allocation2 + $0x808] sm:$0xff]
    %v399 = vld [vmem:[#allocation2 + $0x810] sm:$0xff]
    %v400 = vld [vmem:[#allocation2 + $0x818] sm:$0xff]
    %v401 = vld [vmem:[#allocation2 + $0x820] sm:$0xff]
    %v402 = vld [vmem:[#allocation2 + $0x828] sm:$0xff]
    %v403 = vld [vmem:[#allocation2 + $0x830] sm:$0xff]
    %v404 = vld [vmem:[#allocation2 + $0x838] sm:$0xff]
    %v405 = vld [vmem:[#allocation2 + $0x840] sm:$0xff]
    %v406 = vld [vmem:[#allocation2 + $0x848] sm:$0xff]
    %v407 = vld [vmem:[#allocation2 + $0x850] sm:$0xff]
    %v408 = vld [vmem:[#allocation2 + $0x858] sm:$0xff]
    %v409 = vld [vmem:[#allocation2 + $0x860] sm:$0xff]
    %v410 = vld [vmem:[#allocation2 + $0x868] sm:$0xff]
    %v411 = vld [vmem:[#allocation2 + $0x870] sm:$0xff]
    %v412 = vld [vmem:[#allocation2 + $0x878] sm:$0xff]
    %v413 = vld [vmem:[#allocation2 + $0x880] sm:$0xff]
    %v414 = vld [vmem:[#allocation2 + $0x888] sm:$0xff]
    %v415 = vld [vmem:[#allocation2 + $0x890] sm:$0xff]
    %v416 = vld [vmem:[#allocation2 + $0x898] sm:$0xff]
    %v417 = vld [vmem:[#allocation2 + $0x8a0] sm:$0xff]
    %v418 = vld [vmem:[#allocation2 + $0x8a8] sm:$0xff]
    %v419 = vld [vmem:[#allocation2 + $0x8b0] sm:$0xff]
    %v420 = vld [vmem:[#allocation2 + $0x8b8] sm:$0xff]
    %v421 = vld [vmem:[#allocation2 + $0x8c0] sm:$0xff]
    %v422 = vld [vmem:[#allocation2 + $0x8c8] sm:$0xff]
    %v423 = vld [vmem:[#allocation2 + $0x8d0] sm:$0xff]
    %v424 = vld [vmem:[#allocation2 + $0x8d8] sm:$0xff]
    %v425 = vld [vmem:[#allocation2 + $0x8e0] sm:$0xff]
    %v426 = vld [vmem:[#allocation2 + $0x8e8] sm:$0xff]
    %v427 = vld [vmem:[#allocation2 + $0x8f0] sm:$0xff]
    %v428 = vld [vmem:[#allocation2 + $0x8f8] sm:$0xff]
    %v429 = vld [vmem:[#allocation2 + $0x900] sm:$0xff]
    %v430 = vld [vmem:[#allocation2 + $0x908] sm:$0xff]
    %v431 = vld [vmem:[#allocation2 + $0x910] sm:$0xff]
    %v432 = vld [vmem:[#allocation2 + $0x918] sm:$0xff]
    %v433 = vld [vmem:[#allocation2 + $0x920] sm:$0xff]
    %v434 = vld [vmem:[#allocation2 + $0x928] sm:$0xff]
    %v435 = vld [vmem:[#allocation2 + $0x930] sm:$0xff]
    %v436 = vld [vmem:[#allocation2 + $0x938] sm:$0xff]
    %v437 = vld [vmem:[#allocation2 + $0x940] sm:$0xff]
    %v438 = vld [vmem:[#allocation2 + $0x948] sm:$0xff]
    %v439 = vld [vmem:[#allocation2 + $0x950] sm:$0xff]
    %v440 = vld [vmem:[#allocation2 + $0x958] sm:$0xff]
    %v441 = vld [vmem:[#allocation2 + $0x960] sm:$0xff]
    %v442 = vld [vmem:[#allocation2 + $0x968] sm:$0xff]
    %v443 = vld [vmem:[#allocation2 + $0x970] sm:$0xff]
    %v444 = vld [vmem:[#allocation2 + $0x978] sm:$0xff]
    %v445 = vld [vmem:[#allocation2 + $0x980] sm:$0xff]
    %v446 = vld [vmem:[#allocation2 + $0x988] sm:$0xff]
    %v447 = vld [vmem:[#allocation2 + $0x990] sm:$0xff]
    %v448 = vld [vmem:[#allocation2 + $0x998] sm:$0xff]
    %v449 = vld [vmem:[#allocation2 + $0x9a0] sm:$0xff]
    %v450 = vld [vmem:[#allocation2 + $0x9a8] sm:$0xff]
    %v451 = vld [vmem:[#allocation2 + $0x9b0] sm:$0xff]
    %v452 = vld [vmem:[#allocation2 + $0x9b8] sm:$0xff]
    %v453 = vld [vmem:[#allocation2 + $0x9c0] sm:$0xff]
    %v454 = vld [vmem:[#allocation2 + $0x9c8] sm:$0xff]
    %v455 = vld [vmem:[#allocation2 + $0x9d0] sm:$0xff]
    %v456 = vld [vmem:[#allocation2 + $0x9d8] sm:$0xff]
    %v457 = vld [vmem:[#allocation2 + $0x9e0] sm:$0xff]
    %v458 = vld [vmem:[#allocation2 + $0x9e8] sm:$0xff]
    %v459 = vld [vmem:[#allocation2 + $0x9f0] sm:$0xff]
    %v460 = vld [vmem:[#allocation2 + $0x9f8] sm:$0xff]
    %v461 = vld [vmem:[#allocation2 + $0xa00] sm:$0xff]
    %v462 = vld [vmem:[#allocation2 + $0xa08] sm:$0xff]
    %v463 = vld [vmem:[#allocation2 + $0xa10] sm:$0xff]
    %v464 = vld [vmem:[#allocation2 + $0xa18] sm:$0xff]
    %v465 = vld [vmem:[#allocation2 + $0xa20] sm:$0xff]
    %v466 = vld [vmem:[#allocation2 + $0xa28] sm:$0xff]
    %v467 = vld [vmem:[#allocation2 + $0xa30] sm:$0xff]
    %v468 = vld [vmem:[#allocation2 + $0xa38] sm:$0xff]
    %v469 = vld [vmem:[#allocation2 + $0xa40] sm:$0xff]
    %v470 = vld [vmem:[#allocation2 + $0xa48] sm:$0xff]
    %v471 = vld [vmem:[#allocation2 + $0xa50] sm:$0xff]
    %v472 = vld [vmem:[#allocation2 + $0xa58] sm:$0xff]
    %v473 = vld [vmem:[#allocation2 + $0xa60] sm:$0xff]
    %v474 = vld [vmem:[#allocation2 + $0xa68] sm:$0xff]
    %v475 = vld [vmem:[#allocation2 + $0xa70] sm:$0xff]
    %v476 = vld [vmem:[#allocation2 + $0xa78] sm:$0xff]
    %v477 = vld [vmem:[#allocation2 + $0xa80] sm:$0xff]
    %v478 = vld [vmem:[#allocation2 + $0xa88] sm:$0xff]
    %v479 = vld [vmem:[#allocation2 + $0xa90] sm:$0xff]
    %v480 = vld [vmem:[#allocation2 + $0xa98] sm:$0xff]
    %v481 = vld [vmem:[#allocation2 + $0xaa0] sm:$0xff]
    %v482 = vld [vmem:[#allocation2 + $0xaa8] sm:$0xff]
    %v483 = vld [vmem:[#allocation2 + $0xab0] sm:$0xff]
    %v484 = vld [vmem:[#allocation2 + $0xab8] sm:$0xff]
    %v485 = vld [vmem:[#allocation2 + $0xac0] sm:$0xff]
    %v486 = vld [vmem:[#allocation2 + $0xac8] sm:$0xff]
    %v487 = vld [vmem:[#allocation2 + $0xad0] sm:$0xff]
    %v488 = vld [vmem:[#allocation2 + $0xad8] sm:$0xff]
    %v489 = vld [vmem:[#allocation2 + $0xae0] sm:$0xff]
    %v490 = vld [vmem:[#allocation2 + $0xae8] sm:$0xff]
    %v491 = vld [vmem:[#allocation2 + $0xaf0] sm:$0xff]
    %v492 = vld [vmem:[#allocation2 + $0xaf8] sm:$0xff]
    %v493 = vld [vmem:[#allocation2 + $0xb00] sm:$0xff]
    %v494 = vld [vmem:[#allocation2 + $0xb08] sm:$0xff]
    %v495 = vld [vmem:[#allocation2 + $0xb10] sm:$0xff]
    %v496 = vld [vmem:[#allocation2 + $0xb18] sm:$0xff]
    %v497 = vld [vmem:[#allocation2 + $0xb20] sm:$0xff]
    %v498 = vld [vmem:[#allocation2 + $0xb28] sm:$0xff]
    %v499 = vld [vmem:[#allocation2 + $0xb30] sm:$0xff]
    %v500 = vld [vmem:[#allocation2 + $0xb38] sm:$0xff]
    %v501 = vld [vmem:[#allocation2 + $0xb40] sm:$0xff]
    %v502 = vld [vmem:[#allocation2 + $0xb48] sm:$0xff]
    %v503 = vld [vmem:[#allocation2 + $0xb50] sm:$0xff]
    %v504 = vld [vmem:[#allocation2 + $0xb58] sm:$0xff]
    %v505 = vld [vmem:[#allocation2 + $0xb60] sm:$0xff]
    %v506 = vld [vmem:[#allocation2 + $0xb68] sm:$0xff]
    %v507 = vld [vmem:[#allocation2 + $0xb70] sm:$0xff]
    %v508 = vld [vmem:[#allocation2 + $0xb78] sm:$0xff]
    %v509 = vld [vmem:[#allocation2 + $0xb80] sm:$0xff]
    %v510 = vld [vmem:[#allocation2 + $0xb88] sm:$0xff]
    %v511 = vld [vmem:[#allocation2 + $0xb90] sm:$0xff]
    %v512 = vld [vmem:[#allocation2 + $0xb98] sm:$0xff]
    %v513 = vld [vmem:[#allocation2 + $0xba0] sm:$0xff]
    %v514 = vld [vmem:[#allocation2 + $0xba8] sm:$0xff]
    %v515 = vld [vmem:[#allocation2 + $0xbb0] sm:$0xff]
    %v516 = vld [vmem:[#allocation2 + $0xbb8] sm:$0xff]
    %v517 = vld [vmem:[#allocation2 + $0xbc0] sm:$0xff]
    %v518 = vld [vmem:[#allocation2 + $0xbc8] sm:$0xff]
    %v519 = vld [vmem:[#allocation2 + $0xbd0] sm:$0xff]
    %v520 = vld [vmem:[#allocation2 + $0xbd8] sm:$0xff]
    %v521 = vld [vmem:[#allocation2 + $0xbe0] sm:$0xff]
    %v522 = vld [vmem:[#allocation2 + $0xbe8] sm:$0xff]
    %v523 = vld [vmem:[#allocation2 + $0xbf0] sm:$0xff]
    %v524 = vld [vmem:[#allocation2 + $0xbf8] sm:$0xff]
    %v525 = vld [vmem:[#allocation2 + $0xc00] sm:$0xff]
    %v526 = vld [vmem:[#allocation2 + $0xc08] sm:$0xff]
    %v527 = vld [vmem:[#allocation2 + $0xc10] sm:$0xff]
    %v528 = vld [vmem:[#allocation2 + $0xc18] sm:$0xff]
    %v529 = vld [vmem:[#allocation2 + $0xc20] sm:$0xff]
    %v530 = vld [vmem:[#allocation2 + $0xc28] sm:$0xff]
    %v531 = vld [vmem:[#allocation2 + $0xc30] sm:$0xff]
    %v532 = vld [vmem:[#allocation2 + $0xc38] sm:$0xff]
    %v533 = vld [vmem:[#allocation2 + $0xc40] sm:$0xff]
    %v534 = vld [vmem:[#allocation2 + $0xc48] sm:$0xff]
    %v535 = vld [vmem:[#allocation2 + $0xc50] sm:$0xff]
    %v536 = vld [vmem:[#allocation2 + $0xc58] sm:$0xff]
    %v537 = vld [vmem:[#allocation2 + $0xc60] sm:$0xff]
    %v538 = vld [vmem:[#allocation2 + $0xc68] sm:$0xff]
    %v539 = vld [vmem:[#allocation2 + $0xc70] sm:$0xff]
    %v540 = vld [vmem:[#allocation2 + $0xc78] sm:$0xff]
    %v541 = vld [vmem:[#allocation2 + $0xc80] sm:$0xff]
    %v542 = vld [vmem:[#allocation2 + $0xc88] sm:$0xff]
    %v543 = vld [vmem:[#allocation2 + $0xc90] sm:$0xff]
    %v544 = vld [vmem:[#allocation2 + $0xc98] sm:$0xff]
    %v545 = vld [vmem:[#allocation2 + $0xca0] sm:$0xff]
    %v546 = vld [vmem:[#allocation2 + $0xca8] sm:$0xff]
    %v547 = vld [vmem:[#allocation2 + $0xcb0] sm:$0xff]
    %v548 = vld [vmem:[#allocation2 + $0xcb8] sm:$0xff]
    %v549 = vld [vmem:[#allocation2 + $0xcc0] sm:$0xff]
    %v550 = vld [vmem:[#allocation2 + $0xcc8] sm:$0xff]
    %v551 = vld [vmem:[#allocation2 + $0xcd0] sm:$0xff]
    %v552 = vld [vmem:[#allocation2 + $0xcd8] sm:$0xff]
    %v553 = vld [vmem:[#allocation2 + $0xce0] sm:$0xff]
    %v554 = vld [vmem:[#allocation2 + $0xce8] sm:$0xff]
    %v555 = vld [vmem:[#allocation2 + $0xcf0] sm:$0xff]
    %v556 = vld [vmem:[#allocation2 + $0xcf8] sm:$0xff]
    %v557 = vld [vmem:[#allocation2 + $0xd00] sm:$0xff]
    %v558 = vld [vmem:[#allocation2 + $0xd08] sm:$0xff]
    %v559 = vld [vmem:[#allocation2 + $0xd10] sm:$0xff]
    %v560 = vld [vmem:[#allocation2 + $0xd18] sm:$0xff]
    %v561 = vld [vmem:[#allocation2 + $0xd20] sm:$0xff]
    %v562 = vld [vmem:[#allocation2 + $0xd28] sm:$0xff]
    %v563 = vld [vmem:[#allocation2 + $0xd30] sm:$0xff]
    %v564 = vld [vmem:[#allocation2 + $0xd38] sm:$0xff]
    %v565 = vld [vmem:[#allocation2 + $0xd40] sm:$0xff]
    %v566 = vld [vmem:[#allocation2 + $0xd48] sm:$0xff]
    %v567 = vld [vmem:[#allocation2 + $0xd50] sm:$0xff]
    %v568 = vld [vmem:[#allocation2 + $0xd58] sm:$0xff]
    %v569 = vld [vmem:[#allocation2 + $0xd60] sm:$0xff]
    %v570 = vld [vmem:[#allocation2 + $0xd68] sm:$0xff]
    %v571 = vld [vmem:[#allocation2 + $0xd70] sm:$0xff]
    %v572 = vld [vmem:[#allocation2 + $0xd78] sm:$0xff]
    %v573 = vld [vmem:[#allocation2 + $0xd80] sm:$0xff]
    %v574 = vld [vmem:[#allocation2 + $0xd88] sm:$0xff]
    %v575 = vld [vmem:[#allocation2 + $0xd90] sm:$0xff]
    %v576 = vld [vmem:[#allocation2 + $0xd98] sm:$0xff]
    %v577 = vld [vmem:[#allocation2 + $0xda0] sm:$0xff]
    %v578 = vld [vmem:[#allocation2 + $0xda8] sm:$0xff]
    %v579 = vld [vmem:[#allocation2 + $0xdb0] sm:$0xff]
    %v580 = vld [vmem:[#allocation2 + $0xdb8] sm:$0xff]
    %v581 = vld [vmem:[#allocation2 + $0xdc0] sm:$0xff]
    %v582 = vld [vmem:[#allocation2 + $0xdc8] sm:$0xff]
    %v583 = vld [vmem:[#allocation2 + $0xdd0] sm:$0xff]
    %v584 = vld [vmem:[#allocation2 + $0xdd8] sm:$0xff]
    %v585 = vld [vmem:[#allocation2 + $0xde0] sm:$0xff]
    %v586 = vld [vmem:[#allocation2 + $0xde8] sm:$0xff]
    %v587 = vld [vmem:[#allocation2 + $0xdf0] sm:$0xff]
    %v588 = vld [vmem:[#allocation2 + $0xdf8] sm:$0xff]
    %v589 = vld [vmem:[#allocation2 + $0xe00] sm:$0xff]
    %v590 = vld [vmem:[#allocation2 + $0xe08] sm:$0xff]
    %v591 = vld [vmem:[#allocation2 + $0xe10] sm:$0xff]
    %v592 = vld [vmem:[#allocation2 + $0xe18] sm:$0xff]
    %v593 = vld [vmem:[#allocation2 + $0xe20] sm:$0xff]
    %v594 = vld [vmem:[#allocation2 + $0xe28] sm:$0xff]
    %v595 = vld [vmem:[#allocation2 + $0xe30] sm:$0xff]
    %v596 = vld [vmem:[#allocation2 + $0xe38] sm:$0xff]
    %v597 = vld [vmem:[#allocation2 + $0xe40] sm:$0xff]
    %v598 = vld [vmem:[#allocation2 + $0xe48] sm:$0xff]
    %v599 = vld [vmem:[#allocation2 + $0xe50] sm:$0xff]
    %v600 = vld [vmem:[#allocation2 + $0xe58] sm:$0xff]
    %v601 = vld [vmem:[#allocation2 + $0xe60] sm:$0xff]
    %v602 = vld [vmem:[#allocation2 + $0xe68] sm:$0xff]
    %v603 = vld [vmem:[#allocation2 + $0xe70] sm:$0xff]
    %v604 = vld [vmem:[#allocation2 + $0xe78] sm:$0xff]
    %v605 = vld [vmem:[#allocation2 + $0xe80] sm:$0xff]
    %v606 = vld [vmem:[#allocation2 + $0xe88] sm:$0xff]
    %v607 = vld [vmem:[#allocation2 + $0xe90] sm:$0xff]
    %v608 = vld [vmem:[#allocation2 + $0xe98] sm:$0xff]
    %v609 = vld [vmem:[#allocation2 + $0xea0] sm:$0xff]
    %v610 = vld [vmem:[#allocation2 + $0xea8] sm:$0xff]
    %v611 = vld [vmem:[#allocation2 + $0xeb0] sm:$0xff]
    %v612 = vld [vmem:[#allocation2 + $0xeb8] sm:$0xff]
    %v613 = vld [vmem:[#allocation2 + $0xec0] sm:$0xff]
    %v614 = vld [vmem:[#allocation2 + $0xec8] sm:$0xff]
    %v615 = vld [vmem:[#allocation2 + $0xed0] sm:$0xff]
    %v616 = vld [vmem:[#allocation2 + $0xed8] sm:$0xff]
    %v617 = vld [vmem:[#allocation2 + $0xee0] sm:$0xff]
    %v618 = vld [vmem:[#allocation2 + $0xee8] sm:$0xff]
    %v619 = vld [vmem:[#allocation2 + $0xef0] sm:$0xff]
    %v620 = vld [vmem:[#allocation2 + $0xef8] sm:$0xff]
    %v621 = vld [vmem:[#allocation2 + $0xf00] sm:$0xff]
    %v622 = vld [vmem:[#allocation2 + $0xf08] sm:$0xff]
    %v623 = vld [vmem:[#allocation2 + $0xf10] sm:$0xff]
    %v624 = vld [vmem:[#allocation2 + $0xf18] sm:$0xff]
    %v625 = vld [vmem:[#allocation2 + $0xf20] sm:$0xff]
    %v626 = vld [vmem:[#allocation2 + $0xf28] sm:$0xff]
    %v627 = vld [vmem:[#allocation2 + $0xf30] sm:$0xff]
    %v628 = vld [vmem:[#allocation2 + $0xf38] sm:$0xff]
    %v629 = vld [vmem:[#allocation2 + $0xf40] sm:$0xff]
    %v630 = vld [vmem:[#allocation2 + $0xf48] sm:$0xff]
    %v631 = vld [vmem:[#allocation2 + $0xf50] sm:$0xff]
    %v632 = vld [vmem:[#allocation2 + $0xf58] sm:$0xff]
    %v633 = vld [vmem:[#allocation2 + $0xf60] sm:$0xff]
    %v634 = vld [vmem:[#allocation2 + $0xf68] sm:$0xff]
    %v635 = vld [vmem:[#allocation2 + $0xf70] sm:$0xff]
    %v636 = vld [vmem:[#allocation2 + $0xf78] sm:$0xff]
    %v637 = vld [vmem:[#allocation2 + $0xf80] sm:$0xff]
    %v638 = vld [vmem:[#allocation2 + $0xf88] sm:$0xff]
    %v639 = vld [vmem:[#allocation2 + $0xf90] sm:$0xff]
    %v640 = vld [vmem:[#allocation2 + $0xf98] sm:$0xff]
    %v641 = vld [vmem:[#allocation2 + $0xfa0] sm:$0xff]
    %v642 = vld [vmem:[#allocation2 + $0xfa8] sm:$0xff]
    %v643 = vld [vmem:[#allocation2 + $0xfb0] sm:$0xff]
    %v644 = vld [vmem:[#allocation2 + $0xfb8] sm:$0xff]
    %v645 = vld [vmem:[#allocation2 + $0xfc0] sm:$0xff]
    %v646 = vld [vmem:[#allocation2 + $0xfc8] sm:$0xff]
    %v647 = vld [vmem:[#allocation2 + $0xfd0] sm:$0xff]
    %v648 = vld [vmem:[#allocation2 + $0xfd8] sm:$0xff]
    %v649 = vld [vmem:[#allocation2 + $0xfe0] sm:$0xff]
    %v650 = vld [vmem:[#allocation2 + $0xfe8] sm:$0xff]
    %v651 = vld [vmem:[#allocation2 + $0xff0] sm:$0xff]
    %v652 = vld [vmem:[#allocation2 + $0xff8] sm:$0xff]
    %v653 = vld [vmem:[#allocation4] sm:$0xf]
    %v655 = vlaneseq
    %v656 = vshrl.u32 %v655, 7
    %v657 = vsub.s32 0, %v656
    %v658 = vrot.slane %v653, %v657
    %v659 = vlaneseq
    %v660 = vshrl.u32 %v659, 7
    %v661 = vsub.s32 1, %v660
    %v662 = vrot.slane %v653, %v661
    %v663 = vlaneseq
    %v664 = vshrl.u32 %v663, 7
    %v665 = vsub.s32 2, %v664
    %v666 = vrot.slane %v653, %v665
    %v667 = vlaneseq
    %v668 = vshrl.u32 %v667, 7
    %v669 = vsub.s32 3, %v668
    %v670 = vrot.slane %v653, %v669
    %675 = vmatprep.subr.mxu0 %v142
    %676 = vmatpush1.msra.mxu0 %v141
    %677 = vmatprep.subr.mxu0 %v146
    %678 = vmatpush1.msra.mxu0 %v145
    %679 = vmatprep.subr.mxu0 %v150
    %680 = vmatpush1.msra.mxu0 %v149
    %681 = vmatprep.subr.mxu0 %v154
    %682 = vmatpush1.msra.mxu0 %v153
    %683 = vmatprep.subr.mxu0 %v158
    %684 = vmatpush1.msra.mxu0 %v157
    %685 = vmatprep.subr.mxu0 %v162
    %686 = vmatpush1.msra.mxu0 %v161
    %687 = vmatprep.subr.mxu0 %v166
    %688 = vmatpush1.msra.mxu0 %v165
    %689 = vmatprep.subr.mxu0 %v170
    %690 = vmatpush1.msra.mxu0 %v169
    %691 = vmatprep.subr.mxu0 %v174
    %692 = vmatpush1.msra.mxu0 %v173
    %693 = vmatprep.subr.mxu0 %v178
    %694 = vmatpush1.msra.mxu0 %v177
    %695 = vmatprep.subr.mxu0 %v182
    %696 = vmatpush1.msra.mxu0 %v181
    %697 = vmatprep.subr.mxu0 %v186
    %698 = vmatpush1.msra.mxu0 %v185
    %699 = vmatprep.subr.mxu0 %v190
    %700 = vmatpush1.msra.mxu0 %v189
    %701 = vmatprep.subr.mxu0 %v194
    %702 = vmatpush1.msra.mxu0 %v193
    %703 = vmatprep.subr.mxu0 %v198
    %704 = vmatpush1.msra.mxu0 %v197
    %705 = vmatprep.subr.mxu0 %v202
    %706 = vmatpush1.msra.mxu0 %v201
    %707 = vmatprep.subr.mxu0 %v206
    %708 = vmatpush1.msra.mxu0 %v205
    %709 = vmatprep.subr.mxu0 %v210
    %710 = vmatpush1.msra.mxu0 %v209
    %711 = vmatprep.subr.mxu0 %v214
    %712 = vmatpush1.msra.mxu0 %v213
    %713 = vmatprep.subr.mxu0 %v218
    %714 = vmatpush1.msra.mxu0 %v217
    %715 = vmatprep.subr.mxu0 %v222
    %716 = vmatpush1.msra.mxu0 %v221
    %717 = vmatprep.subr.mxu0 %v226
    %718 = vmatpush1.msra.mxu0 %v225
    %719 = vmatprep.subr.mxu0 %v230
    %720 = vmatpush1.msra.mxu0 %v229
    %721 = vmatprep.subr.mxu0 %v234
    %722 = vmatpush1.msra.mxu0 %v233
    %723 = vmatprep.subr.mxu0 %v238
    %724 = vmatpush1.msra.mxu0 %v237
    %725 = vmatprep.subr.mxu0 %v242
    %726 = vmatpush1.msra.mxu0 %v241
    %727 = vmatprep.subr.mxu0 %v246
    %728 = vmatpush1.msra.mxu0 %v245
    %729 = vmatprep.subr.mxu0 %v250
    %730 = vmatpush1.msra.mxu0 %v249
    %731 = vmatprep.subr.mxu0 %v254
    %732 = vmatpush1.msra.mxu0 %v253
    %733 = vmatprep.subr.mxu0 %v258
    %734 = vmatpush1.msra.mxu0 %v257
    %735 = vmatprep.subr.mxu0 %v262
    %736 = vmatpush1.msra.mxu0 %v261
    %737 = vmatprep.subr.mxu0 %v266
    %738 = vmatpush1.msra.mxu0 %v265
    %739 = vmatprep.mubr.f32.mxu0 %v134
    %740 = vmatmul.mubr.f32.gmra.mrb[0].mxu0 %v133
    %v741 = vpop.f32.mrb[0].mxu0
    %v742 = vadd.f32 %v658, %v741
    %v743 = vpop.f32.mrb[0].mxu0
    %v744 = vadd.f32 %v662, %v743
    %745 = vdwg.mxu0
    %746 = vmatprep.subr.mxu0 %v270
    %747 = vmatpush1.msra.mxu0 %v269
    %748 = vmatprep.subr.mxu0 %v274
    %749 = vmatpush1.msra.mxu0 %v273
    %750 = vmatprep.subr.mxu0 %v278
    %751 = vmatpush1.msra.mxu0 %v277
    %752 = vmatprep.subr.mxu0 %v282
    %753 = vmatpush1.msra.mxu0 %v281
    %754 = vmatprep.subr.mxu0 %v286
    %755 = vmatpush1.msra.mxu0 %v285
    %756 = vmatprep.subr.mxu0 %v290
    %757 = vmatpush1.msra.mxu0 %v289
    %758 = vmatprep.subr.mxu0 %v294
    %759 = vmatpush1.msra.mxu0 %v293
    %760 = vmatprep.subr.mxu0 %v298
    %761 = vmatpush1.msra.mxu0 %v297
    %762 = vmatprep.subr.mxu0 %v302
    %763 = vmatpush1.msra.mxu0 %v301
    %764 = vmatprep.subr.mxu0 %v306
    %765 = vmatpush1.msra.mxu0 %v305
    %766 = vmatprep.subr.mxu0 %v310
    %767 = vmatpush1.msra.mxu0 %v309
    %768 = vmatprep.subr.mxu0 %v314
    %769 = vmatpush1.msra.mxu0 %v313
    %770 = vmatprep.subr.mxu0 %v318
    %771 = vmatpush1.msra.mxu0 %v317
    %772 = vmatprep.subr.mxu0 %v322
    %773 = vmatpush1.msra.mxu0 %v321
    %774 = vmatprep.subr.mxu0 %v326
    %775 = vmatpush1.msra.mxu0 %v325
    %776 = vmatprep.subr.mxu0 %v330
    %777 = vmatpush1.msra.mxu0 %v329
    %778 = vmatprep.subr.mxu0 %v334
    %779 = vmatpush1.msra.mxu0 %v333
    %780 = vmatprep.subr.mxu0 %v338
    %781 = vmatpush1.msra.mxu0 %v337
    %782 = vmatprep.subr.mxu0 %v342
    %783 = vmatpush1.msra.mxu0 %v341
    %784 = vmatprep.subr.mxu0 %v346
    %785 = vmatpush1.msra.mxu0 %v345
    %786 = vmatprep.subr.mxu0 %v350
    %787 = vmatpush1.msra.mxu0 %v349
    %788 = vmatprep.subr.mxu0 %v354
    %789 = vmatpush1.msra.mxu0 %v353
    %790 = vmatprep.subr.mxu0 %v358
    %791 = vmatpush1.msra.mxu0 %v357
    %792 = vmatprep.subr.mxu0 %v362
    %793 = vmatpush1.msra.mxu0 %v361
    %794 = vmatprep.subr.mxu0 %v366
    %795 = vmatpush1.msra.mxu0 %v365
    %796 = vmatprep.subr.mxu0 %v370
    %797 = vmatpush1.msra.mxu0 %v369
    %798 = vmatprep.subr.mxu0 %v374
    %799 = vmatpush1.msra.mxu0 %v373
    %800 = vmatprep.subr.mxu0 %v378
    %801 = vmatpush1.msra.mxu0 %v377
    %802 = vmatprep.subr.mxu0 %v382
    %803 = vmatpush1.msra.mxu0 %v381
    %804 = vmatprep.subr.mxu0 %v386
    %805 = vmatpush1.msra.mxu0 %v385
    %806 = vmatprep.subr.mxu0 %v390
    %807 = vmatpush1.msra.mxu0 %v389
    %808 = vmatprep.subr.mxu0 %v394
    %809 = vmatpush1.msra.mxu0 %v393
    %810 = vmatprep.mubr.f32.mxu0 %v136
    %811 = vmatmul.mubr.f32.gmra.mrb[0].mxu0 %v135
    %v812 = vpop.f32.mrb[0].mxu0
    %v813 = vadd.f32 %v742, %v812
    %v814 = vpop.f32.mrb[0].mxu0
    %v815 = vadd.f32 %v744, %v814
    %816 = vdwg.mxu0
    %817 = vmatprep.subr.mxu0 %v398
    %818 = vmatpush1.msra.mxu0 %v397
    %819 = vmatprep.subr.mxu0 %v402
    %820 = vmatpush1.msra.mxu0 %v401
    %821 = vmatprep.subr.mxu0 %v406
    %822 = vmatpush1.msra.mxu0 %v405
    %823 = vmatprep.subr.mxu0 %v410
    %824 = vmatpush1.msra.mxu0 %v409
    %825 = vmatprep.subr.mxu0 %v414
    %826 = vmatpush1.msra.mxu0 %v413
    %827 = vmatprep.subr.mxu0 %v418
    %828 = vmatpush1.msra.mxu0 %v417
    %829 = vmatprep.subr.mxu0 %v422
    %830 = vmatpush1.msra.mxu0 %v421
    %831 = vmatprep.subr.mxu0 %v426
    %832 = vmatpush1.msra.mxu0 %v425
    %833 = vmatprep.subr.mxu0 %v430
    %834 = vmatpush1.msra.mxu0 %v429
    %835 = vmatprep.subr.mxu0 %v434
    %836 = vmatpush1.msra.mxu0 %v433
    %837 = vmatprep.subr.mxu0 %v438
    %838 = vmatpush1.msra.mxu0 %v437
    %839 = vmatprep.subr.mxu0 %v442
    %840 = vmatpush1.msra.mxu0 %v441
    %841 = vmatprep.subr.mxu0 %v446
    %842 = vmatpush1.msra.mxu0 %v445
    %843 = vmatprep.subr.mxu0 %v450
    %844 = vmatpush1.msra.mxu0 %v449
    %845 = vmatprep.subr.mxu0 %v454
    %846 = vmatpush1.msra.mxu0 %v453
    %847 = vmatprep.subr.mxu0 %v458
    %848 = vmatpush1.msra.mxu0 %v457
    %849 = vmatprep.subr.mxu0 %v462
    %850 = vmatpush1.msra.mxu0 %v461
    %851 = vmatprep.subr.mxu0 %v466
    %852 = vmatpush1.msra.mxu0 %v465
    %853 = vmatprep.subr.mxu0 %v470
    %854 = vmatpush1.msra.mxu0 %v469
    %855 = vmatprep.subr.mxu0 %v474
    %856 = vmatpush1.msra.mxu0 %v473
    %857 = vmatprep.subr.mxu0 %v478
    %858 = vmatpush1.msra.mxu0 %v477
    %859 = vmatprep.subr.mxu0 %v482
    %860 = vmatpush1.msra.mxu0 %v481
    %861 = vmatprep.subr.mxu0 %v486
    %862 = vmatpush1.msra.mxu0 %v485
    %863 = vmatprep.subr.mxu0 %v490
    %864 = vmatpush1.msra.mxu0 %v489
    %865 = vmatprep.subr.mxu0 %v494
    %866 = vmatpush1.msra.mxu0 %v493
    %867 = vmatprep.subr.mxu0 %v498
    %868 = vmatpush1.msra.mxu0 %v497
    %869 = vmatprep.subr.mxu0 %v502
    %870 = vmatpush1.msra.mxu0 %v501
    %871 = vmatprep.subr.mxu0 %v506
    %872 = vmatpush1.msra.mxu0 %v505
    %873 = vmatprep.subr.mxu0 %v510
    %874 = vmatpush1.msra.mxu0 %v509
    %875 = vmatprep.subr.mxu0 %v514
    %876 = vmatpush1.msra.mxu0 %v513
    %877 = vmatprep.subr.mxu0 %v518
    %878 = vmatpush1.msra.mxu0 %v517
    %879 = vmatprep.subr.mxu0 %v522
    %880 = vmatpush1.msra.mxu0 %v521
    %881 = vmatprep.mubr.f32.mxu0 %v138
    %882 = vmatmul.mubr.f32.gmra.mrb[0].mxu0 %v137
    %v883 = vpop.f32.mrb[0].mxu0
    %v884 = vadd.f32 %v813, %v883
    %v885 = vpop.f32.mrb[0].mxu0
    %v886 = vadd.f32 %v815, %v885
    %887 = vdwg.mxu0
    %888 = vmatprep.subr.mxu0 %v526
    %889 = vmatpush1.msra.mxu0 %v525
    %890 = vmatprep.subr.mxu0 %v530
    %891 = vmatpush1.msra.mxu0 %v529
    %892 = vmatprep.subr.mxu0 %v534
    %893 = vmatpush1.msra.mxu0 %v533
    %894 = vmatprep.subr.mxu0 %v538
    %895 = vmatpush1.msra.mxu0 %v537
    %896 = vmatprep.subr.mxu0 %v542
    %897 = vmatpush1.msra.mxu0 %v541
    %898 = vmatprep.subr.mxu0 %v546
    %899 = vmatpush1.msra.mxu0 %v545
    %900 = vmatprep.subr.mxu0 %v550
    %901 = vmatpush1.msra.mxu0 %v549
    %902 = vmatprep.subr.mxu0 %v554
    %903 = vmatpush1.msra.mxu0 %v553
    %904 = vmatprep.subr.mxu0 %v558
    %905 = vmatpush1.msra.mxu0 %v557
    %906 = vmatprep.subr.mxu0 %v562
    %907 = vmatpush1.msra.mxu0 %v561
    %908 = vmatprep.subr.mxu0 %v566
    %909 = vmatpush1.msra.mxu0 %v565
    %910 = vmatprep.subr.mxu0 %v570
    %911 = vmatpush1.msra.mxu0 %v569
    %912 = vmatprep.subr.mxu0 %v574
    %913 = vmatpush1.msra.mxu0 %v573
    %914 = vmatprep.subr.mxu0 %v578
    %915 = vmatpush1.msra.mxu0 %v577
    %916 = vmatprep.subr.mxu0 %v582
    %917 = vmatpush1.msra.mxu0 %v581
    %918 = vmatprep.subr.mxu0 %v586
    %919 = vmatpush1.msra.mxu0 %v585
    %920 = vmatprep.subr.mxu0 %v590
    %921 = vmatpush1.msra.mxu0 %v589
    %922 = vmatprep.subr.mxu0 %v594
    %923 = vmatpush1.msra.mxu0 %v593
    %924 = vmatprep.subr.mxu0 %v598
    %925 = vmatpush1.msra.mxu0 %v597
    %926 = vmatprep.subr.mxu0 %v602
    %927 = vmatpush1.msra.mxu0 %v601
    %928 = vmatprep.subr.mxu0 %v606
    %929 = vmatpush1.msra.mxu0 %v605
    %930 = vmatprep.subr.mxu0 %v610
    %931 = vmatpush1.msra.mxu0 %v609
    %932 = vmatprep.subr.mxu0 %v614
    %933 = vmatpush1.msra.mxu0 %v613
    %934 = vmatprep.subr.mxu0 %v618
    %935 = vmatpush1.msra.mxu0 %v617
    %936 = vmatprep.subr.mxu0 %v622
    %937 = vmatpush1.msra.mxu0 %v621
    %938 = vmatprep.subr.mxu0 %v626
    %939 = vmatpush1.msra.mxu0 %v625
    %940 = vmatprep.subr.mxu0 %v630
    %941 = vmatpush1.msra.mxu0 %v629
    %942 = vmatprep.subr.mxu0 %v634
    %943 = vmatpush1.msra.mxu0 %v633
    %944 = vmatprep.subr.mxu0 %v638
    %945 = vmatpush1.msra.mxu0 %v637
    %946 = vmatprep.subr.mxu0 %v642
    %947 = vmatpush1.msra.mxu0 %v641
    %948 = vmatprep.subr.mxu0 %v646
    %949 = vmatpush1.msra.mxu0 %v645
    %950 = vmatprep.subr.mxu0 %v650
    %951 = vmatpush1.msra.mxu0 %v649
    %952 = vmatprep.mubr.f32.mxu0 %v140
    %953 = vmatmul.mubr.f32.gmra.mrb[0].mxu0 %v139
    %v954 = vpop.f32.mrb[0].mxu0
    %v955 = vadd.f32 %v884, %v954
    %v956 = vpop.f32.mrb[0].mxu0
    %v957 = vadd.f32 %v886, %v956
    %958 = vdwg.mxu0
    %959 = vmatprep.subr.mxu0 %v144
    %960 = vmatpush1.msra.mxu0 %v143
    %961 = vmatprep.subr.mxu0 %v148
    %962 = vmatpush1.msra.mxu0 %v147
    %963 = vmatprep.subr.mxu0 %v152
    %964 = vmatpush1.msra.mxu0 %v151
    %965 = vmatprep.subr.mxu0 %v156
    %966 = vmatpush1.msra.mxu0 %v155
    %967 = vmatprep.subr.mxu0 %v160
    %968 = vmatpush1.msra.mxu0 %v159
    %969 = vmatprep.subr.mxu0 %v164
    %970 = vmatpush1.msra.mxu0 %v163
    %971 = vmatprep.subr.mxu0 %v168
    %972 = vmatpush1.msra.mxu0 %v167
    %973 = vmatprep.subr.mxu0 %v172
    %974 = vmatpush1.msra.mxu0 %v171
    %975 = vmatprep.subr.mxu0 %v176
    %976 = vmatpush1.msra.mxu0 %v175
    %977 = vmatprep.subr.mxu0 %v180
    %978 = vmatpush1.msra.mxu0 %v179
    %979 = vmatprep.subr.mxu0 %v184
    %980 = vmatpush1.msra.mxu0 %v183
    %981 = vmatprep.subr.mxu0 %v188
    %982 = vmatpush1.msra.mxu0 %v187
    %983 = vmatprep.subr.mxu0 %v192
    %984 = vmatpush1.msra.mxu0 %v191
    %985 = vmatprep.subr.mxu0 %v196
    %986 = vmatpush1.msra.mxu0 %v195
    %987 = vmatprep.subr.mxu0 %v200
    %988 = vmatpush1.msra.mxu0 %v199
    %989 = vmatprep.subr.mxu0 %v204
    %990 = vmatpush1.msra.mxu0 %v203
    %991 = vmatprep.subr.mxu0 %v208
    %992 = vmatpush1.msra.mxu0 %v207
    %993 = vmatprep.subr.mxu0 %v212
    %994 = vmatpush1.msra.mxu0 %v211
    %995 = vmatprep.subr.mxu0 %v216
    %996 = vmatpush1.msra.mxu0 %v215
    %997 = vmatprep.subr.mxu0 %v220
    %998 = vmatpush1.msra.mxu0 %v219
    %999 = vmatprep.subr.mxu0 %v224
    %1000 = vmatpush1.msra.mxu0 %v223
    %1001 = vmatprep.subr.mxu0 %v228
    %1002 = vmatpush1.msra.mxu0 %v227
    %1003 = vmatprep.subr.mxu0 %v232
    %1004 = vmatpush1.msra.mxu0 %v231
    %1005 = vmatprep.subr.mxu0 %v236
    %1006 = vmatpush1.msra.mxu0 %v235
    %1007 = vmatprep.subr.mxu0 %v240
    %1008 = vmatpush1.msra.mxu0 %v239
    %1009 = vmatprep.subr.mxu0 %v244
    %1010 = vmatpush1.msra.mxu0 %v243
    %1011 = vmatprep.subr.mxu0 %v248
    %1012 = vmatpush1.msra.mxu0 %v247
    %1013 = vmatprep.subr.mxu0 %v252
    %1014 = vmatpush1.msra.mxu0 %v251
    %1015 = vmatprep.subr.mxu0 %v256
    %1016 = vmatpush1.msra.mxu0 %v255
    %1017 = vmatprep.subr.mxu0 %v260
    %1018 = vmatpush1.msra.mxu0 %v259
    %1019 = vmatprep.subr.mxu0 %v264
    %1020 = vmatpush1.msra.mxu0 %v263
    %1021 = vmatprep.subr.mxu0 %v268
    %1022 = vmatpush1.msra.mxu0 %v267
    %1023 = vmatprep.mubr.f32.mxu0 %v134
    %1024 = vmatmul.mubr.f32.gmra.mrb[0].mxu0 %v133
    %v1025 = vpop.f32.mrb[0].mxu0
    %v1026 = vadd.f32 %v666, %v1025
    %v1027 = vpop.f32.mrb[0].mxu0
    %v1028 = vadd.f32 %v670, %v1027
    %1029 = vdwg.mxu0
    %1030 = vmatprep.subr.mxu0 %v272
    %1031 = vmatpush1.msra.mxu0 %v271
    %1032 = vmatprep.subr.mxu0 %v276
    %1033 = vmatpush1.msra.mxu0 %v275
    %1034 = vmatprep.subr.mxu0 %v280
    %1035 = vmatpush1.msra.mxu0 %v279
    %1036 = vmatprep.subr.mxu0 %v284
    %1037 = vmatpush1.msra.mxu0 %v283
    %1038 = vmatprep.subr.mxu0 %v288
    %1039 = vmatpush1.msra.mxu0 %v287
    %1040 = vmatprep.subr.mxu0 %v292
    %1041 = vmatpush1.msra.mxu0 %v291
    %1042 = vmatprep.subr.mxu0 %v296
    %1043 = vmatpush1.msra.mxu0 %v295
    %1044 = vmatprep.subr.mxu0 %v300
    %1045 = vmatpush1.msra.mxu0 %v299
    %1046 = vmatprep.subr.mxu0 %v304
    %1047 = vmatpush1.msra.mxu0 %v303
    %1048 = vmatprep.subr.mxu0 %v308
    %1049 = vmatpush1.msra.mxu0 %v307
    %1050 = vmatprep.subr.mxu0 %v312
    %1051 = vmatpush1.msra.mxu0 %v311
    %1052 = vmatprep.subr.mxu0 %v316
    %1053 = vmatpush1.msra.mxu0 %v315
    %1054 = vmatprep.subr.mxu0 %v320
    %1055 = vmatpush1.msra.mxu0 %v319
    %1056 = vmatprep.subr.mxu0 %v324
    %1057 = vmatpush1.msra.mxu0 %v323
    %1058 = vmatprep.subr.mxu0 %v328
    %1059 = vmatpush1.msra.mxu0 %v327
    %1060 = vmatprep.subr.mxu0 %v332
    %1061 = vmatpush1.msra.mxu0 %v331
    %1062 = vmatprep.subr.mxu0 %v336
    %1063 = vmatpush1.msra.mxu0 %v335
    %1064 = vmatprep.subr.mxu0 %v340
    %1065 = vmatpush1.msra.mxu0 %v339
    %1066 = vmatprep.subr.mxu0 %v344
    %1067 = vmatpush1.msra.mxu0 %v343
    %1068 = vmatprep.subr.mxu0 %v348
    %1069 = vmatpush1.msra.mxu0 %v347
    %1070 = vmatprep.subr.mxu0 %v352
    %1071 = vmatpush1.msra.mxu0 %v351
    %1072 = vmatprep.subr.mxu0 %v356
    %1073 = vmatpush1.msra.mxu0 %v355
    %1074 = vmatprep.subr.mxu0 %v360
    %1075 = vmatpush1.msra.mxu0 %v359
    %1076 = vmatprep.subr.mxu0 %v364
    %1077 = vmatpush1.msra.mxu0 %v363
    %1078 = vmatprep.subr.mxu0 %v368
    %1079 = vmatpush1.msra.mxu0 %v367
    %1080 = vmatprep.subr.mxu0 %v372
    %1081 = vmatpush1.msra.mxu0 %v371
    %1082 = vmatprep.subr.mxu0 %v376
    %1083 = vmatpush1.msra.mxu0 %v375
    %1084 = vmatprep.subr.mxu0 %v380
    %1085 = vmatpush1.msra.mxu0 %v379
    %1086 = vmatprep.subr.mxu0 %v384
    %1087 = vmatpush1.msra.mxu0 %v383
    %1088 = vmatprep.subr.mxu0 %v388
    %1089 = vmatpush1.msra.mxu0 %v387
    %1090 = vmatprep.subr.mxu0 %v392
    %1091 = vmatpush1.msra.mxu0 %v391
    %1092 = vmatprep.subr.mxu0 %v396
    %1093 = vmatpush1.msra.mxu0 %v395
    %1094 = vmatprep.mubr.f32.mxu0 %v136
    %1095 = vmatmul.mubr.f32.gmra.mrb[0].mxu0 %v135
    %v1096 = vpop.f32.mrb[0].mxu0
    %v1097 = vadd.f32 %v1026, %v1096
    %v1098 = vpop.f32.mrb[0].mxu0
    %v1099 = vadd.f32 %v1028, %v1098
    %1100 = vdwg.mxu0
    %1101 = vmatprep.subr.mxu0 %v400
    %1102 = vmatpush1.msra.mxu0 %v399
    %1103 = vmatprep.subr.mxu0 %v404
    %1104 = vmatpush1.msra.mxu0 %v403
    %1105 = vmatprep.subr.mxu0 %v408
    %1106 = vmatpush1.msra.mxu0 %v407
    %1107 = vmatprep.subr.mxu0 %v412
    %1108 = vmatpush1.msra.mxu0 %v411
    %1109 = vmatprep.subr.mxu0 %v416
    %1110 = vmatpush1.msra.mxu0 %v415
    %1111 = vmatprep.subr.mxu0 %v420
    %1112 = vmatpush1.msra.mxu0 %v419
    %1113 = vmatprep.subr.mxu0 %v424
    %1114 = vmatpush1.msra.mxu0 %v423
    %1115 = vmatprep.subr.mxu0 %v428
    %1116 = vmatpush1.msra.mxu0 %v427
    %1117 = vmatprep.subr.mxu0 %v432
    %1118 = vmatpush1.msra.mxu0 %v431
    %1119 = vmatprep.subr.mxu0 %v436
    %1120 = vmatpush1.msra.mxu0 %v435
    %1121 = vmatprep.subr.mxu0 %v440
    %1122 = vmatpush1.msra.mxu0 %v439
    %1123 = vmatprep.subr.mxu0 %v444
    %1124 = vmatpush1.msra.mxu0 %v443
    %1125 = vmatprep.subr.mxu0 %v448
    %1126 = vmatpush1.msra.mxu0 %v447
    %1127 = vmatprep.subr.mxu0 %v452
    %1128 = vmatpush1.msra.mxu0 %v451
    %1129 = vmatprep.subr.mxu0 %v456
    %1130 = vmatpush1.msra.mxu0 %v455
    %1131 = vmatprep.subr.mxu0 %v460
    %1132 = vmatpush1.msra.mxu0 %v459
    %1133 = vmatprep.subr.mxu0 %v464
    %1134 = vmatpush1.msra.mxu0 %v463
    %1135 = vmatprep.subr.mxu0 %v468
    %1136 = vmatpush1.msra.mxu0 %v467
    %1137 = vmatprep.subr.mxu0 %v472
    %1138 = vmatpush1.msra.mxu0 %v471
    %1139 = vmatprep.subr.mxu0 %v476
    %1140 = vmatpush1.msra.mxu0 %v475
    %1141 = vmatprep.subr.mxu0 %v480
    %1142 = vmatpush1.msra.mxu0 %v479
    %1143 = vmatprep.subr.mxu0 %v484
    %1144 = vmatpush1.msra.mxu0 %v483
    %1145 = vmatprep.subr.mxu0 %v488
    %1146 = vmatpush1.msra.mxu0 %v487
    %1147 = vmatprep.subr.mxu0 %v492
    %1148 = vmatpush1.msra.mxu0 %v491
    %1149 = vmatprep.subr.mxu0 %v496
    %1150 = vmatpush1.msra.mxu0 %v495
    %1151 = vmatprep.subr.mxu0 %v500
    %1152 = vmatpush1.msra.mxu0 %v499
    %1153 = vmatprep.subr.mxu0 %v504
    %1154 = vmatpush1.msra.mxu0 %v503
    %1155 = vmatprep.subr.mxu0 %v508
    %1156 = vmatpush1.msra.mxu0 %v507
    %1157 = vmatprep.subr.mxu0 %v512
    %1158 = vmatpush1.msra.mxu0 %v511
    %1159 = vmatprep.subr.mxu0 %v516
    %1160 = vmatpush1.msra.mxu0 %v515
    %1161 = vmatprep.subr.mxu0 %v520
    %1162 = vmatpush1.msra.mxu0 %v519
    %1163 = vmatprep.subr.mxu0 %v524
    %1164 = vmatpush1.msra.mxu0 %v523
    %1165 = vmatprep.mubr.f32.mxu0 %v138
    %1166 = vmatmul.mubr.f32.gmra.mrb[0].mxu0 %v137
    %v1167 = vpop.f32.mrb[0].mxu0
    %v1168 = vadd.f32 %v1097, %v1167
    %v1169 = vpop.f32.mrb[0].mxu0
    %v1170 = vadd.f32 %v1099, %v1169
    %1171 = vdwg.mxu0
    %1172 = vmatprep.subr.mxu0 %v528
    %1173 = vmatpush1.msra.mxu0 %v527
    %1174 = vmatprep.subr.mxu0 %v532
    %1175 = vmatpush1.msra.mxu0 %v531
    %1176 = vmatprep.subr.mxu0 %v536
    %1177 = vmatpush1.msra.mxu0 %v535
    %1178 = vmatprep.subr.mxu0 %v540
    %1179 = vmatpush1.msra.mxu0 %v539
    %1180 = vmatprep.subr.mxu0 %v544
    %1181 = vmatpush1.msra.mxu0 %v543
    %1182 = vmatprep.subr.mxu0 %v548
    %1183 = vmatpush1.msra.mxu0 %v547
    %1184 = vmatprep.subr.mxu0 %v552
    %1185 = vmatpush1.msra.mxu0 %v551
    %1186 = vmatprep.subr.mxu0 %v556
    %1187 = vmatpush1.msra.mxu0 %v555
    %1188 = vmatprep.subr.mxu0 %v560
    %1189 = vmatpush1.msra.mxu0 %v559
    %1190 = vmatprep.subr.mxu0 %v564
    %1191 = vmatpush1.msra.mxu0 %v563
    %1192 = vmatprep.subr.mxu0 %v568
    %1193 = vmatpush1.msra.mxu0 %v567
    %1194 = vmatprep.subr.mxu0 %v572
    %1195 = vmatpush1.msra.mxu0 %v571
    %1196 = vmatprep.subr.mxu0 %v576
    %1197 = vmatpush1.msra.mxu0 %v575
    %1198 = vmatprep.subr.mxu0 %v580
    %1199 = vmatpush1.msra.mxu0 %v579
    %1200 = vmatprep.subr.mxu0 %v584
    %1201 = vmatpush1.msra.mxu0 %v583
    %1202 = vmatprep.subr.mxu0 %v588
    %1203 = vmatpush1.msra.mxu0 %v587
    %1204 = vmatprep.subr.mxu0 %v592
    %1205 = vmatpush1.msra.mxu0 %v591
    %1206 = vmatprep.subr.mxu0 %v596
    %1207 = vmatpush1.msra.mxu0 %v595
    %1208 = vmatprep.subr.mxu0 %v600
    %1209 = vmatpush1.msra.mxu0 %v599
    %1210 = vmatprep.subr.mxu0 %v604
    %1211 = vmatpush1.msra.mxu0 %v603
    %1212 = vmatprep.subr.mxu0 %v608
    %1213 = vmatpush1.msra.mxu0 %v607
    %1214 = vmatprep.subr.mxu0 %v612
    %1215 = vmatpush1.msra.mxu0 %v611
    %1216 = vmatprep.subr.mxu0 %v616
    %1217 = vmatpush1.msra.mxu0 %v615
    %1218 = vmatprep.subr.mxu0 %v620
    %1219 = vmatpush1.msra.mxu0 %v619
    %1220 = vmatprep.subr.mxu0 %v624
    %1221 = vmatpush1.msra.mxu0 %v623
    %1222 = vmatprep.subr.mxu0 %v628
    %1223 = vmatpush1.msra.mxu0 %v627
    %1224 = vmatprep.subr.mxu0 %v632
    %1225 = vmatpush1.msra.mxu0 %v631
    %1226 = vmatprep.subr.mxu0 %v636
    %1227 = vmatpush1.msra.mxu0 %v635
    %1228 = vmatprep.subr.mxu0 %v640
    %1229 = vmatpush1.msra.mxu0 %v639
    %1230 = vmatprep.subr.mxu0 %v644
    %1231 = vmatpush1.msra.mxu0 %v643
    %1232 = vmatprep.subr.mxu0 %v648
    %1233 = vmatpush1.msra.mxu0 %v647
    %1234 = vmatprep.subr.mxu0 %v652
    %1235 = vmatpush1.msra.mxu0 %v651
    %1236 = vmatprep.mubr.f32.mxu0 %v140
    %1237 = vmatmul.mubr.f32.gmra.mrb[0].mxu0 %v139
    %v1238 = vpop.f32.mrb[0].mxu0
    %v1239 = vadd.f32 %v1168, %v1238
    %v1240 = vpop.f32.mrb[0].mxu0
    %v1241 = vadd.f32 %v1170, %v1240
    %1242 = vdwg.mxu0
    %v1243 = vmax.f32 %v955, 0.0
    %v1244 = vmax.f32 %v957, 0.0
    %v1245 = vmax.f32 %v1239, 0.0
    %v1246 = vmax.f32 %v1241, 0.0
    %v1247 = vld [vmem:[#allocation6] sm:$0xff]
    %v1248 = vld [vmem:[#allocation6 + $0x8] sm:$0xff]
    %v1249 = vld [vmem:[#allocation6 + $0x10] sm:$0xff]
    %v1250 = vld [vmem:[#allocation6 + $0x18] sm:$0xff]
    %v1251 = vld [vmem:[#allocation6 + $0x20] sm:$0xff]
    %v1252 = vld [vmem:[#allocation6 + $0x28] sm:$0xff]
    %v1253 = vld [vmem:[#allocation6 + $0x30] sm:$0xff]
    %v1254 = vld [vmem:[#allocation6 + $0x38] sm:$0xff]
    %v1255 = vld [vmem:[#allocation6 + $0x40] sm:$0xff]
    %v1256 = vld [vmem:[#allocation6 + $0x48] sm:$0xff]
    %v1257 = vld [vmem:[#allocation6 + $0x50] sm:$0xff]
    %v1258 = vld [vmem:[#allocation6 + $0x58] sm:$0xff]
    %v1259 = vld [vmem:[#allocation6 + $0x60] sm:$0xff]
    %v1260 = vld [vmem:[#allocation6 + $0x68] sm:$0xff]
    %v1261 = vld [vmem:[#allocation6 + $0x70] sm:$0xff]
    %v1262 = vld [vmem:[#allocation6 + $0x78] sm:$0xff]
    %v1263 = vld [vmem:[#allocation6 + $0x80] sm:$0xff]
    %v1264 = vld [vmem:[#allocation6 + $0x88] sm:$0xff]
    %v1265 = vld [vmem:[#allocation6 + $0x90] sm:$0xff]
    %v1266 = vld [vmem:[#allocation6 + $0x98] sm:$0xff]
    %v1267 = vld [vmem:[#allocation6 + $0xa0] sm:$0xff]
    %v1268 = vld [vmem:[#allocation6 + $0xa8] sm:$0xff]
    %v1269 = vld [vmem:[#allocation6 + $0xb0] sm:$0xff]
    %v1270 = vld [vmem:[#allocation6 + $0xb8] sm:$0xff]
    %v1271 = vld [vmem:[#allocation6 + $0xc0] sm:$0xff]
    %v1272 = vld [vmem:[#allocation6 + $0xc8] sm:$0xff]
    %v1273 = vld [vmem:[#allocation6 + $0xd0] sm:$0xff]
    %v1274 = vld [vmem:[#allocation6 + $0xd8] sm:$0xff]
    %v1275 = vld [vmem:[#allocation6 + $0xe0] sm:$0xff]
    %v1276 = vld [vmem:[#allocation6 + $0xe8] sm:$0xff]
    %v1277 = vld [vmem:[#allocation6 + $0xf0] sm:$0xff]
    %v1278 = vld [vmem:[#allocation6 + $0xf8] sm:$0xff]
    %v1279 = vld [vmem:[#allocation6 + $0x100] sm:$0xff]
    %v1280 = vld [vmem:[#allocation6 + $0x108] sm:$0xff]
    %v1281 = vld [vmem:[#allocation6 + $0x110] sm:$0xff]
    %v1282 = vld [vmem:[#allocation6 + $0x118] sm:$0xff]
    %v1283 = vld [vmem:[#allocation6 + $0x120] sm:$0xff]
    %v1284 = vld [vmem:[#allocation6 + $0x128] sm:$0xff]
    %v1285 = vld [vmem:[#allocation6 + $0x130] sm:$0xff]
    %v1286 = vld [vmem:[#allocation6 + $0x138] sm:$0xff]
    %v1287 = vld [vmem:[#allocation6 + $0x140] sm:$0xff]
    %v1288 = vld [vmem:[#allocation6 + $0x148] sm:$0xff]
    %v1289 = vld [vmem:[#allocation6 + $0x150] sm:$0xff]
    %v1290 = vld [vmem:[#allocation6 + $0x158] sm:$0xff]
    %v1291 = vld [vmem:[#allocation6 + $0x160] sm:$0xff]
    %v1292 = vld [vmem:[#allocation6 + $0x168] sm:$0xff]
    %v1293 = vld [vmem:[#allocation6 + $0x170] sm:$0xff]
    %v1294 = vld [vmem:[#allocation6 + $0x178] sm:$0xff]
    %v1295 = vld [vmem:[#allocation6 + $0x180] sm:$0xff]
    %v1296 = vld [vmem:[#allocation6 + $0x188] sm:$0xff]
    %v1297 = vld [vmem:[#allocation6 + $0x190] sm:$0xff]
    %v1298 = vld [vmem:[#allocation6 + $0x198] sm:$0xff]
    %v1299 = vld [vmem:[#allocation6 + $0x1a0] sm:$0xff]
    %v1300 = vld [vmem:[#allocation6 + $0x1a8] sm:$0xff]
    %v1301 = vld [vmem:[#allocation6 + $0x1b0] sm:$0xff]
    %v1302 = vld [vmem:[#allocation6 + $0x1b8] sm:$0xff]
    %v1303 = vld [vmem:[#allocation6 + $0x1c0] sm:$0xff]
    %v1304 = vld [vmem:[#allocation6 + $0x1c8] sm:$0xff]
    %v1305 = vld [vmem:[#allocation6 + $0x1d0] sm:$0xff]
    %v1306 = vld [vmem:[#allocation6 + $0x1d8] sm:$0xff]
    %v1307 = vld [vmem:[#allocation6 + $0x1e0] sm:$0xff]
    %v1308 = vld [vmem:[#allocation6 + $0x1e8] sm:$0xff]
    %v1309 = vld [vmem:[#allocation6 + $0x1f0] sm:$0xff]
    %v1310 = vld [vmem:[#allocation6 + $0x1f8] sm:$0xff]
    %v1311 = vld [vmem:[#allocation6 + $0x200] sm:$0xff]
    %v1312 = vld [vmem:[#allocation6 + $0x208] sm:$0xff]
    %v1313 = vld [vmem:[#allocation6 + $0x210] sm:$0xff]
    %v1314 = vld [vmem:[#allocation6 + $0x218] sm:$0xff]
    %v1315 = vld [vmem:[#allocation6 + $0x220] sm:$0xff]
    %v1316 = vld [vmem:[#allocation6 + $0x228] sm:$0xff]
    %v1317 = vld [vmem:[#allocation6 + $0x230] sm:$0xff]
    %v1318 = vld [vmem:[#allocation6 + $0x238] sm:$0xff]
    %v1319 = vld [vmem:[#allocation6 + $0x240] sm:$0xff]
    %v1320 = vld [vmem:[#allocation6 + $0x248] sm:$0xff]
    %v1321 = vld [vmem:[#allocation6 + $0x250] sm:$0xff]
    %v1322 = vld [vmem:[#allocation6 + $0x258] sm:$0xff]
    %v1323 = vld [vmem:[#allocation6 + $0x260] sm:$0xff]
    %v1324 = vld [vmem:[#allocation6 + $0x268] sm:$0xff]
    %v1325 = vld [vmem:[#allocation6 + $0x270] sm:$0xff]
    %v1326 = vld [vmem:[#allocation6 + $0x278] sm:$0xff]
    %v1327 = vld [vmem:[#allocation6 + $0x280] sm:$0xff]
    %v1328 = vld [vmem:[#allocation6 + $0x288] sm:$0xff]
    %v1329 = vld [vmem:[#allocation6 + $0x290] sm:$0xff]
    %v1330 = vld [vmem:[#allocation6 + $0x298] sm:$0xff]
    %v1331 = vld [vmem:[#allocation6 + $0x2a0] sm:$0xff]
    %v1332 = vld [vmem:[#allocation6 + $0x2a8] sm:$0xff]
    %v1333 = vld [vmem:[#allocation6 + $0x2b0] sm:$0xff]
    %v1334 = vld [vmem:[#allocation6 + $0x2b8] sm:$0xff]
    %v1335 = vld [vmem:[#allocation6 + $0x2c0] sm:$0xff]
    %v1336 = vld [vmem:[#allocation6 + $0x2c8] sm:$0xff]
    %v1337 = vld [vmem:[#allocation6 + $0x2d0] sm:$0xff]
    %v1338 = vld [vmem:[#allocation6 + $0x2d8] sm:$0xff]
    %v1339 = vld [vmem:[#allocation6 + $0x2e0] sm:$0xff]
    %v1340 = vld [vmem:[#allocation6 + $0x2e8] sm:$0xff]
    %v1341 = vld [vmem:[#allocation6 + $0x2f0] sm:$0xff]
    %v1342 = vld [vmem:[#allocation6 + $0x2f8] sm:$0xff]
    %v1343 = vld [vmem:[#allocation6 + $0x300] sm:$0xff]
    %v1344 = vld [vmem:[#allocation6 + $0x308] sm:$0xff]
    %v1345 = vld [vmem:[#allocation6 + $0x310] sm:$0xff]
    %v1346 = vld [vmem:[#allocation6 + $0x318] sm:$0xff]
    %v1347 = vld [vmem:[#allocation6 + $0x320] sm:$0xff]
    %v1348 = vld [vmem:[#allocation6 + $0x328] sm:$0xff]
    %v1349 = vld [vmem:[#allocation6 + $0x330] sm:$0xff]
    %v1350 = vld [vmem:[#allocation6 + $0x338] sm:$0xff]
    %v1351 = vld [vmem:[#allocation6 + $0x340] sm:$0xff]
    %v1352 = vld [vmem:[#allocation6 + $0x348] sm:$0xff]
    %v1353 = vld [vmem:[#allocation6 + $0x350] sm:$0xff]
    %v1354 = vld [vmem:[#allocation6 + $0x358] sm:$0xff]
    %v1355 = vld [vmem:[#allocation6 + $0x360] sm:$0xff]
    %v1356 = vld [vmem:[#allocation6 + $0x368] sm:$0xff]
    %v1357 = vld [vmem:[#allocation6 + $0x370] sm:$0xff]
    %v1358 = vld [vmem:[#allocation6 + $0x378] sm:$0xff]
    %v1359 = vld [vmem:[#allocation6 + $0x380] sm:$0xff]
    %v1360 = vld [vmem:[#allocation6 + $0x388] sm:$0xff]
    %v1361 = vld [vmem:[#allocation6 + $0x390] sm:$0xff]
    %v1362 = vld [vmem:[#allocation6 + $0x398] sm:$0xff]
    %v1363 = vld [vmem:[#allocation6 + $0x3a0] sm:$0xff]
    %v1364 = vld [vmem:[#allocation6 + $0x3a8] sm:$0xff]
    %v1365 = vld [vmem:[#allocation6 + $0x3b0] sm:$0xff]
    %v1366 = vld [vmem:[#allocation6 + $0x3b8] sm:$0xff]
    %v1367 = vld [vmem:[#allocation6 + $0x3c0] sm:$0xff]
    %v1368 = vld [vmem:[#allocation6 + $0x3c8] sm:$0xff]
    %v1369 = vld [vmem:[#allocation6 + $0x3d0] sm:$0xff]
    %v1370 = vld [vmem:[#allocation6 + $0x3d8] sm:$0xff]
    %v1371 = vld [vmem:[#allocation6 + $0x3e0] sm:$0xff]
    %v1372 = vld [vmem:[#allocation6 + $0x3e8] sm:$0xff]
    %v1373 = vld [vmem:[#allocation6 + $0x3f0] sm:$0xff]
    %v1374 = vld [vmem:[#allocation6 + $0x3f8] sm:$0xff]
    %v1375 = vld [vmem:[#allocation7] sm:$0x3]
    %v1377 = vlaneseq
    %v1378 = vshrl.u32 %v1377, 7
    %v1379 = vsub.s32 0, %v1378
    %v1380 = vrot.slane %v1375, %v1379
    %v1381 = vlaneseq
    %v1382 = vshrl.u32 %v1381, 7
    %v1383 = vsub.s32 1, %v1382
    %v1384 = vrot.slane %v1375, %v1383
    %1387 = vmatprep.subr.mxu0 %v1248
    %1388 = vmatpush1.msra.mxu0 %v1247
    %1389 = vmatprep.subr.mxu0 %v1250
    %1390 = vmatpush1.msra.mxu0 %v1249
    %1391 = vmatprep.subr.mxu0 %v1252
    %1392 = vmatpush1.msra.mxu0 %v1251
    %1393 = vmatprep.subr.mxu0 %v1254
    %1394 = vmatpush1.msra.mxu0 %v1253
    %1395 = vmatprep.subr.mxu0 %v1256
    %1396 = vmatpush1.msra.mxu0 %v1255
    %1397 = vmatprep.subr.mxu0 %v1258
    %1398 = vmatpush1.msra.mxu0 %v1257
    %1399 = vmatprep.subr.mxu0 %v1260
    %1400 = vmatpush1.msra.mxu0 %v1259
    %1401 = vmatprep.subr.mxu0 %v1262
    %1402 = vmatpush1.msra.mxu0 %v1261
    %1403 = vmatprep.subr.mxu0 %v1264
    %1404 = vmatpush1.msra.mxu0 %v1263
    %1405 = vmatprep.subr.mxu0 %v1266
    %1406 = vmatpush1.msra.mxu0 %v1265
    %1407 = vmatprep.subr.mxu0 %v1268
    %1408 = vmatpush1.msra.mxu0 %v1267
    %1409 = vmatprep.subr.mxu0 %v1270
    %1410 = vmatpush1.msra.mxu0 %v1269
    %1411 = vmatprep.subr.mxu0 %v1272
    %1412 = vmatpush1.msra.mxu0 %v1271
    %1413 = vmatprep.subr.mxu0 %v1274
    %1414 = vmatpush1.msra.mxu0 %v1273
    %1415 = vmatprep.subr.mxu0 %v1276
    %1416 = vmatpush1.msra.mxu0 %v1275
    %1417 = vmatprep.subr.mxu0 %v1278
    %1418 = vmatpush1.msra.mxu0 %v1277
    %1419 = vmatprep.subr.mxu0 %v1280
    %1420 = vmatpush1.msra.mxu0 %v1279
    %1421 = vmatprep.subr.mxu0 %v1282
    %1422 = vmatpush1.msra.mxu0 %v1281
    %1423 = vmatprep.subr.mxu0 %v1284
    %1424 = vmatpush1.msra.mxu0 %v1283
    %1425 = vmatprep.subr.mxu0 %v1286
    %1426 = vmatpush1.msra.mxu0 %v1285
    %1427 = vmatprep.subr.mxu0 %v1288
    %1428 = vmatpush1.msra.mxu0 %v1287
    %1429 = vmatprep.subr.mxu0 %v1290
    %1430 = vmatpush1.msra.mxu0 %v1289
    %1431 = vmatprep.subr.mxu0 %v1292
    %1432 = vmatpush1.msra.mxu0 %v1291
    %1433 = vmatprep.subr.mxu0 %v1294
    %1434 = vmatpush1.msra.mxu0 %v1293
    %1435 = vmatprep.subr.mxu0 %v1296
    %1436 = vmatpush1.msra.mxu0 %v1295
    %1437 = vmatprep.subr.mxu0 %v1298
    %1438 = vmatpush1.msra.mxu0 %v1297
    %1439 = vmatprep.subr.mxu0 %v1300
    %1440 = vmatpush1.msra.mxu0 %v1299
    %1441 = vmatprep.subr.mxu0 %v1302
    %1442 = vmatpush1.msra.mxu0 %v1301
    %1443 = vmatprep.subr.mxu0 %v1304
    %1444 = vmatpush1.msra.mxu0 %v1303
    %1445 = vmatprep.subr.mxu0 %v1306
    %1446 = vmatpush1.msra.mxu0 %v1305
    %1447 = vmatprep.subr.mxu0 %v1308
    %1448 = vmatpush1.msra.mxu0 %v1307
    %1449 = vmatprep.subr.mxu0 %v1310
    %1450 = vmatpush1.msra.mxu0 %v1309
    %1451 = vmatprep.mubr.f32.mxu0 %v1244
    %1452 = vmatmul.mubr.f32.gmra.mrb[0].mxu0 %v1243
    %v1453 = vpop.f32.mrb[0].mxu0
    %v1454 = vadd.f32 %v1380, %v1453
    %v1455 = vpop.f32.mrb[0].mxu0
    %v1456 = vadd.f32 %v1384, %v1455
    %1457 = vdwg.mxu0
    %1458 = vmatprep.subr.mxu0 %v1312
    %1459 = vmatpush1.msra.mxu0 %v1311
    %1460 = vmatprep.subr.mxu0 %v1314
    %1461 = vmatpush1.msra.mxu0 %v1313
    %1462 = vmatprep.subr.mxu0 %v1316
    %1463 = vmatpush1.msra.mxu0 %v1315
    %1464 = vmatprep.subr.mxu0 %v1318
    %1465 = vmatpush1.msra.mxu0 %v1317
    %1466 = vmatprep.subr.mxu0 %v1320
    %1467 = vmatpush1.msra.mxu0 %v1319
    %1468 = vmatprep.subr.mxu0 %v1322
    %1469 = vmatpush1.msra.mxu0 %v1321
    %1470 = vmatprep.subr.mxu0 %v1324
    %1471 = vmatpush1.msra.mxu0 %v1323
    %1472 = vmatprep.subr.mxu0 %v1326
    %1473 = vmatpush1.msra.mxu0 %v1325
    %1474 = vmatprep.subr.mxu0 %v1328
    %1475 = vmatpush1.msra.mxu0 %v1327
    %1476 = vmatprep.subr.mxu0 %v1330
    %1477 = vmatpush1.msra.mxu0 %v1329
    %1478 = vmatprep.subr.mxu0 %v1332
    %1479 = vmatpush1.msra.mxu0 %v1331
    %1480 = vmatprep.subr.mxu0 %v1334
    %1481 = vmatpush1.msra.mxu0 %v1333
    %1482 = vmatprep.subr.mxu0 %v1336
    %1483 = vmatpush1.msra.mxu0 %v1335
    %1484 = vmatprep.subr.mxu0 %v1338
    %1485 = vmatpush1.msra.mxu0 %v1337
    %1486 = vmatprep.subr.mxu0 %v1340
    %1487 = vmatpush1.msra.mxu0 %v1339
    %1488 = vmatprep.subr.mxu0 %v1342
    %1489 = vmatpush1.msra.mxu0 %v1341
    %1490 = vmatprep.subr.mxu0 %v1344
    %1491 = vmatpush1.msra.mxu0 %v1343
    %1492 = vmatprep.subr.mxu0 %v1346
    %1493 = vmatpush1.msra.mxu0 %v1345
    %1494 = vmatprep.subr.mxu0 %v1348
    %1495 = vmatpush1.msra.mxu0 %v1347
    %1496 = vmatprep.subr.mxu0 %v1350
    %1497 = vmatpush1.msra.mxu0 %v1349
    %1498 = vmatprep.subr.mxu0 %v1352
    %1499 = vmatpush1.msra.mxu0 %v1351
    %1500 = vmatprep.subr.mxu0 %v1354
    %1501 = vmatpush1.msra.mxu0 %v1353
    %1502 = vmatprep.subr.mxu0 %v1356
    %1503 = vmatpush1.msra.mxu0 %v1355
    %1504 = vmatprep.subr.mxu0 %v1358
    %1505 = vmatpush1.msra.mxu0 %v1357
    %1506 = vmatprep.subr.mxu0 %v1360
    %1507 = vmatpush1.msra.mxu0 %v1359
    %1508 = vmatprep.subr.mxu0 %v1362
    %1509 = vmatpush1.msra.mxu0 %v1361
    %1510 = vmatprep.subr.mxu0 %v1364
    %1511 = vmatpush1.msra.mxu0 %v1363
    %1512 = vmatprep.subr.mxu0 %v1366
    %1513 = vmatpush1.msra.mxu0 %v1365
    %1514 = vmatprep.subr.mxu0 %v1368
    %1515 = vmatpush1.msra.mxu0 %v1367
    %1516 = vmatprep.subr.mxu0 %v1370
    %1517 = vmatpush1.msra.mxu0 %v1369
    %1518 = vmatprep.subr.mxu0 %v1372
    %1519 = vmatpush1.msra.mxu0 %v1371
    %1520 = vmatprep.subr.mxu0 %v1374
    %1521 = vmatpush1.msra.mxu0 %v1373
    %1522 = vmatprep.mubr.f32.mxu0 %v1246
    %1523 = vmatmul.mubr.f32.gmra.mrb[0].mxu0 %v1245
    %v1524 = vpop.f32.mrb[0].mxu0
    %v1525 = vadd.f32 %v1454, %v1524
    %v1526 = vpop.f32.mrb[0].mxu0
    %v1527 = vadd.f32 %v1456, %v1526
    %1528 = vdwg.mxu0
    %v1529 = vmax.f32 %v1525, 0.0
    %v1530 = vmax.f32 %v1527, 0.0
    %v1531 = vld [vmem:[#allocation9] sm:$0xff]
    %v1532 = vld [vmem:[#allocation9 + $0x8] sm:$0xff]
    %v1533 = vld [vmem:[#allocation9 + $0x10] sm:$0xff]
    %v1534 = vld [vmem:[#allocation9 + $0x18] sm:$0xff]
    %v1535 = vld [vmem:[#allocation9 + $0x20] sm:$0xff]
    %v1536 = vld [vmem:[#allocation9 + $0x28] sm:$0xff]
    %v1537 = vld [vmem:[#allocation9 + $0x30] sm:$0xff]
    %v1538 = vld [vmem:[#allocation9 + $0x38] sm:$0xff]
    %v1539 = vld [vmem:[#allocation9 + $0x40] sm:$0xff]
    %v1540 = vld [vmem:[#allocation9 + $0x48] sm:$0xff]
    %v1541 = vld [vmem:[#allocation9 + $0x50] sm:$0xff]
    %v1542 = vld [vmem:[#allocation9 + $0x58] sm:$0xff]
    %v1543 = vld [vmem:[#allocation9 + $0x60] sm:$0xff]
    %v1544 = vld [vmem:[#allocation9 + $0x68] sm:$0xff]
    %v1545 = vld [vmem:[#allocation9 + $0x70] sm:$0xff]
    %v1546 = vld [vmem:[#allocation9 + $0x78] sm:$0xff]
    %v1547 = vld [vmem:[#allocation9 + $0x80] sm:$0xff]
    %v1548 = vld [vmem:[#allocation9 + $0x88] sm:$0xff]
    %v1549 = vld [vmem:[#allocation9 + $0x90] sm:$0xff]
    %v1550 = vld [vmem:[#allocation9 + $0x98] sm:$0xff]
    %v1551 = vld [vmem:[#allocation9 + $0xa0] sm:$0xff]
    %v1552 = vld [vmem:[#allocation9 + $0xa8] sm:$0xff]
    %v1553 = vld [vmem:[#allocation9 + $0xb0] sm:$0xff]
    %v1554 = vld [vmem:[#allocation9 + $0xb8] sm:$0xff]
    %v1555 = vld [vmem:[#allocation9 + $0xc0] sm:$0xff]
    %v1556 = vld [vmem:[#allocation9 + $0xc8] sm:$0xff]
    %v1557 = vld [vmem:[#allocation9 + $0xd0] sm:$0xff]
    %v1558 = vld [vmem:[#allocation9 + $0xd8] sm:$0xff]
    %v1559 = vld [vmem:[#allocation9 + $0xe0] sm:$0xff]
    %v1560 = vld [vmem:[#allocation9 + $0xe8] sm:$0xff]
    %v1561 = vld [vmem:[#allocation9 + $0xf0] sm:$0xff]
    %v1562 = vld [vmem:[#allocation9 + $0xf8] sm:$0xff]
    %v1563 = vld [vmem:[#allocation9 + $0x100] sm:$0xff]
    %v1564 = vld [vmem:[#allocation9 + $0x108] sm:$0xff]
    %v1565 = vld [vmem:[#allocation9 + $0x110] sm:$0xff]
    %v1566 = vld [vmem:[#allocation9 + $0x118] sm:$0xff]
    %v1567 = vld [vmem:[#allocation9 + $0x120] sm:$0xff]
    %v1568 = vld [vmem:[#allocation9 + $0x128] sm:$0xff]
    %v1569 = vld [vmem:[#allocation9 + $0x130] sm:$0xff]
    %v1570 = vld [vmem:[#allocation9 + $0x138] sm:$0xff]
    %v1571 = vld [vmem:[#allocation9 + $0x140] sm:$0xff]
    %v1572 = vld [vmem:[#allocation9 + $0x148] sm:$0xff]
    %v1573 = vld [vmem:[#allocation9 + $0x150] sm:$0xff]
    %v1574 = vld [vmem:[#allocation9 + $0x158] sm:$0xff]
    %v1575 = vld [vmem:[#allocation9 + $0x160] sm:$0xff]
    %v1576 = vld [vmem:[#allocation9 + $0x168] sm:$0xff]
    %v1577 = vld [vmem:[#allocation9 + $0x170] sm:$0xff]
    %v1578 = vld [vmem:[#allocation9 + $0x178] sm:$0xff]
    %v1579 = vld [vmem:[#allocation9 + $0x180] sm:$0xff]
    %v1580 = vld [vmem:[#allocation9 + $0x188] sm:$0xff]
    %v1581 = vld [vmem:[#allocation9 + $0x190] sm:$0xff]
    %v1582 = vld [vmem:[#allocation9 + $0x198] sm:$0xff]
    %v1583 = vld [vmem:[#allocation9 + $0x1a0] sm:$0xff]
    %v1584 = vld [vmem:[#allocation9 + $0x1a8] sm:$0xff]
    %v1585 = vld [vmem:[#allocation9 + $0x1b0] sm:$0xff]
    %v1586 = vld [vmem:[#allocation9 + $0x1b8] sm:$0xff]
    %v1587 = vld [vmem:[#allocation9 + $0x1c0] sm:$0xff]
    %v1588 = vld [vmem:[#allocation9 + $0x1c8] sm:$0xff]
    %v1589 = vld [vmem:[#allocation9 + $0x1d0] sm:$0xff]
    %v1590 = vld [vmem:[#allocation9 + $0x1d8] sm:$0xff]
    %v1591 = vld [vmem:[#allocation9 + $0x1e0] sm:$0xff]
    %v1592 = vld [vmem:[#allocation9 + $0x1e8] sm:$0xff]
    %v1593 = vld [vmem:[#allocation9 + $0x1f0] sm:$0xff]
    %v1594 = vld [vmem:[#allocation9 + $0x1f8] sm:$0xff]
    %v1595 = vld [vmem:[#allocation9 + $0x200] sm:$0xff]
    %v1596 = vld [vmem:[#allocation9 + $0x208] sm:$0xff]
    %v1597 = vld [vmem:[#allocation9 + $0x210] sm:$0xff]
    %v1598 = vld [vmem:[#allocation9 + $0x218] sm:$0xff]
    %v1599 = vld [vmem:[#allocation9 + $0x220] sm:$0xff]
    %v1600 = vld [vmem:[#allocation9 + $0x228] sm:$0xff]
    %v1601 = vld [vmem:[#allocation9 + $0x230] sm:$0xff]
    %v1602 = vld [vmem:[#allocation9 + $0x238] sm:$0xff]
    %v1603 = vld [vmem:[#allocation9 + $0x240] sm:$0xff]
    %v1604 = vld [vmem:[#allocation9 + $0x248] sm:$0xff]
    %v1605 = vld [vmem:[#allocation9 + $0x250] sm:$0xff]
    %v1606 = vld [vmem:[#allocation9 + $0x258] sm:$0xff]
    %v1607 = vld [vmem:[#allocation9 + $0x260] sm:$0xff]
    %v1608 = vld [vmem:[#allocation9 + $0x268] sm:$0xff]
    %v1609 = vld [vmem:[#allocation9 + $0x270] sm:$0xff]
    %v1610 = vld [vmem:[#allocation9 + $0x278] sm:$0xff]
    %v1611 = vld [vmem:[#allocation9 + $0x280] sm:$0xff]
    %v1612 = vld [vmem:[#allocation9 + $0x288] sm:$0xff]
    %v1613 = vld [vmem:[#allocation9 + $0x290] sm:$0xff]
    %v1614 = vld [vmem:[#allocation9 + $0x298] sm:$0xff]
    %v1615 = vld [vmem:[#allocation9 + $0x2a0] sm:$0xff]
    %v1616 = vld [vmem:[#allocation9 + $0x2a8] sm:$0xff]
    %v1617 = vld [vmem:[#allocation9 + $0x2b0] sm:$0xff]
    %v1618 = vld [vmem:[#allocation9 + $0x2b8] sm:$0xff]
    %v1619 = vld [vmem:[#allocation9 + $0x2c0] sm:$0xff]
    %v1620 = vld [vmem:[#allocation9 + $0x2c8] sm:$0xff]
    %v1621 = vld [vmem:[#allocation9 + $0x2d0] sm:$0xff]
    %v1622 = vld [vmem:[#allocation9 + $0x2d8] sm:$0xff]
    %v1623 = vld [vmem:[#allocation9 + $0x2e0] sm:$0xff]
    %v1624 = vld [vmem:[#allocation9 + $0x2e8] sm:$0xff]
    %v1625 = vld [vmem:[#allocation9 + $0x2f0] sm:$0xff]
    %v1626 = vld [vmem:[#allocation9 + $0x2f8] sm:$0xff]
    %v1627 = vld [vmem:[#allocation9 + $0x300] sm:$0xff]
    %v1628 = vld [vmem:[#allocation9 + $0x308] sm:$0xff]
    %v1629 = vld [vmem:[#allocation9 + $0x310] sm:$0xff]
    %v1630 = vld [vmem:[#allocation9 + $0x318] sm:$0xff]
    %v1631 = vld [vmem:[#allocation9 + $0x320] sm:$0xff]
    %v1632 = vld [vmem:[#allocation9 + $0x328] sm:$0xff]
    %v1633 = vld [vmem:[#allocation9 + $0x330] sm:$0xff]
    %v1634 = vld [vmem:[#allocation9 + $0x338] sm:$0xff]
    %v1635 = vld [vmem:[#allocation9 + $0x340] sm:$0xff]
    %v1636 = vld [vmem:[#allocation9 + $0x348] sm:$0xff]
    %v1637 = vld [vmem:[#allocation9 + $0x350] sm:$0xff]
    %v1638 = vld [vmem:[#allocation9 + $0x358] sm:$0xff]
    %v1639 = vld [vmem:[#allocation9 + $0x360] sm:$0xff]
    %v1640 = vld [vmem:[#allocation9 + $0x368] sm:$0xff]
    %v1641 = vld [vmem:[#allocation9 + $0x370] sm:$0xff]
    %v1642 = vld [vmem:[#allocation9 + $0x378] sm:$0xff]
    %v1643 = vld [vmem:[#allocation9 + $0x380] sm:$0xff]
    %v1644 = vld [vmem:[#allocation9 + $0x388] sm:$0xff]
    %v1645 = vld [vmem:[#allocation9 + $0x390] sm:$0xff]
    %v1646 = vld [vmem:[#allocation9 + $0x398] sm:$0xff]
    %v1647 = vld [vmem:[#allocation9 + $0x3a0] sm:$0xff]
    %v1648 = vld [vmem:[#allocation9 + $0x3a8] sm:$0xff]
    %v1649 = vld [vmem:[#allocation9 + $0x3b0] sm:$0xff]
    %v1650 = vld [vmem:[#allocation9 + $0x3b8] sm:$0xff]
    %v1651 = vld [vmem:[#allocation9 + $0x3c0] sm:$0xff]
    %v1652 = vld [vmem:[#allocation9 + $0x3c8] sm:$0xff]
    %v1653 = vld [vmem:[#allocation9 + $0x3d0] sm:$0xff]
    %v1654 = vld [vmem:[#allocation9 + $0x3d8] sm:$0xff]
    %v1655 = vld [vmem:[#allocation9 + $0x3e0] sm:$0xff]
    %v1656 = vld [vmem:[#allocation9 + $0x3e8] sm:$0xff]
    %v1657 = vld [vmem:[#allocation9 + $0x3f0] sm:$0xff]
    %v1658 = vld [vmem:[#allocation9 + $0x3f8] sm:$0xff]
    %v1659 = vld [vmem:[#allocation10] sm:$0xf]
    %v1661 = vlaneseq
    %v1662 = vshrl.u32 %v1661, 7
    %v1663 = vsub.s32 0, %v1662
    %v1664 = vrot.slane %v1659, %v1663
    %v1665 = vlaneseq
    %v1666 = vshrl.u32 %v1665, 7
    %v1667 = vsub.s32 2, %v1666
    %v1668 = vrot.slane %v1659, %v1667
    %v1669 = vlaneseq
    %v1670 = vshrl.u32 %v1669, 7
    %v1671 = vsub.s32 3, %v1670
    %v1672 = vrot.slane %v1659, %v1671
    %1676 = vmatprep.subr.mxu0 %v1532
    %1677 = vmatpush1.msra.mxu0 %v1531
    %1678 = vmatprep.subr.mxu0 %v1536
    %1679 = vmatpush1.msra.mxu0 %v1535
    %1680 = vmatprep.subr.mxu0 %v1540
    %1681 = vmatpush1.msra.mxu0 %v1539
    %1682 = vmatprep.subr.mxu0 %v1544
    %1683 = vmatpush1.msra.mxu0 %v1543
    %1684 = vmatprep.subr.mxu0 %v1548
    %1685 = vmatpush1.msra.mxu0 %v1547
    %1686 = vmatprep.subr.mxu0 %v1552
    %1687 = vmatpush1.msra.mxu0 %v1551
    %1688 = vmatprep.subr.mxu0 %v1556
    %1689 = vmatpush1.msra.mxu0 %v1555
    %1690 = vmatprep.subr.mxu0 %v1560
    %1691 = vmatpush1.msra.mxu0 %v1559
    %1692 = vmatprep.subr.mxu0 %v1564
    %1693 = vmatpush1.msra.mxu0 %v1563
    %1694 = vmatprep.subr.mxu0 %v1568
    %1695 = vmatpush1.msra.mxu0 %v1567
    %1696 = vmatprep.subr.mxu0 %v1572
    %1697 = vmatpush1.msra.mxu0 %v1571
    %1698 = vmatprep.subr.mxu0 %v1576
    %1699 = vmatpush1.msra.mxu0 %v1575
    %1700 = vmatprep.subr.mxu0 %v1580
    %1701 = vmatpush1.msra.mxu0 %v1579
    %1702 = vmatprep.subr.mxu0 %v1584
    %1703 = vmatpush1.msra.mxu0 %v1583
    %1704 = vmatprep.subr.mxu0 %v1588
    %1705 = vmatpush1.msra.mxu0 %v1587
    %1706 = vmatprep.subr.mxu0 %v1592
    %1707 = vmatpush1.msra.mxu0 %v1591
    %1708 = vmatprep.subr.mxu0 %v1596
    %1709 = vmatpush1.msra.mxu0 %v1595
    %1710 = vmatprep.subr.mxu0 %v1600
    %1711 = vmatpush1.msra.mxu0 %v1599
    %1712 = vmatprep.subr.mxu0 %v1604
    %1713 = vmatpush1.msra.mxu0 %v1603
    %1714 = vmatprep.subr.mxu0 %v1608
    %1715 = vmatpush1.msra.mxu0 %v1607
    %1716 = vmatprep.subr.mxu0 %v1612
    %1717 = vmatpush1.msra.mxu0 %v1611
    %1718 = vmatprep.subr.mxu0 %v1616
    %1719 = vmatpush1.msra.mxu0 %v1615
    %1720 = vmatprep.subr.mxu0 %v1620
    %1721 = vmatpush1.msra.mxu0 %v1619
    %1722 = vmatprep.subr.mxu0 %v1624
    %1723 = vmatpush1.msra.mxu0 %v1623
    %1724 = vmatprep.subr.mxu0 %v1628
    %1725 = vmatpush1.msra.mxu0 %v1627
    %1726 = vmatprep.subr.mxu0 %v1632
    %1727 = vmatpush1.msra.mxu0 %v1631
    %1728 = vmatprep.subr.mxu0 %v1636
    %1729 = vmatpush1.msra.mxu0 %v1635
    %1730 = vmatprep.subr.mxu0 %v1640
    %1731 = vmatpush1.msra.mxu0 %v1639
    %1732 = vmatprep.subr.mxu0 %v1644
    %1733 = vmatpush1.msra.mxu0 %v1643
    %1734 = vmatprep.subr.mxu0 %v1648
    %1735 = vmatpush1.msra.mxu0 %v1647
    %1736 = vmatprep.subr.mxu0 %v1652
    %1737 = vmatpush1.msra.mxu0 %v1651
    %1738 = vmatprep.subr.mxu0 %v1656
    %1739 = vmatpush1.msra.mxu0 %v1655
    %1740 = vmatprep.mubr.f32.mxu0 %v1530
    %1741 = vmatmul.mubr.f32.gmra.mrb[0].mxu0 %v1529
    %v1742 = vpop.f32.mrb[0].mxu0
    %v1743 = vadd.f32 %v1664, %v1742
    %v1744 = vpop.f32.mrb[0].mxu0
    %1745 = vdwg.mxu0
    %1746 = vmatprep.subr.mxu0 %v1534
    %1747 = vmatpush1.msra.mxu0 %v1533
    %1748 = vmatprep.subr.mxu0 %v1538
    %1749 = vmatpush1.msra.mxu0 %v1537
    %1750 = vmatprep.subr.mxu0 %v1542
    %1751 = vmatpush1.msra.mxu0 %v1541
    %1752 = vmatprep.subr.mxu0 %v1546
    %1753 = vmatpush1.msra.mxu0 %v1545
    %1754 = vmatprep.subr.mxu0 %v1550
    %1755 = vmatpush1.msra.mxu0 %v1549
    %1756 = vmatprep.subr.mxu0 %v1554
    %1757 = vmatpush1.msra.mxu0 %v1553
    %1758 = vmatprep.subr.mxu0 %v1558
    %1759 = vmatpush1.msra.mxu0 %v1557
    %1760 = vmatprep.subr.mxu0 %v1562
    %1761 = vmatpush1.msra.mxu0 %v1561
    %1762 = vmatprep.subr.mxu0 %v1566
    %1763 = vmatpush1.msra.mxu0 %v1565
    %1764 = vmatprep.subr.mxu0 %v1570
    %1765 = vmatpush1.msra.mxu0 %v1569
    %1766 = vmatprep.subr.mxu0 %v1574
    %1767 = vmatpush1.msra.mxu0 %v1573
    %1768 = vmatprep.subr.mxu0 %v1578
    %1769 = vmatpush1.msra.mxu0 %v1577
    %1770 = vmatprep.subr.mxu0 %v1582
    %1771 = vmatpush1.msra.mxu0 %v1581
    %1772 = vmatprep.subr.mxu0 %v1586
    %1773 = vmatpush1.msra.mxu0 %v1585
    %1774 = vmatprep.subr.mxu0 %v1590
    %1775 = vmatpush1.msra.mxu0 %v1589
    %1776 = vmatprep.subr.mxu0 %v1594
    %1777 = vmatpush1.msra.mxu0 %v1593
    %1778 = vmatprep.subr.mxu0 %v1598
    %1779 = vmatpush1.msra.mxu0 %v1597
    %1780 = vmatprep.subr.mxu0 %v1602
    %1781 = vmatpush1.msra.mxu0 %v1601
    %1782 = vmatprep.subr.mxu0 %v1606
    %1783 = vmatpush1.msra.mxu0 %v1605
    %1784 = vmatprep.subr.mxu0 %v1610
    %1785 = vmatpush1.msra.mxu0 %v1609
    %1786 = vmatprep.subr.mxu0 %v1614
    %1787 = vmatpush1.msra.mxu0 %v1613
    %1788 = vmatprep.subr.mxu0 %v1618
    %1789 = vmatpush1.msra.mxu0 %v1617
    %1790 = vmatprep.subr.mxu0 %v1622
    %1791 = vmatpush1.msra.mxu0 %v1621
    %1792 = vmatprep.subr.mxu0 %v1626
    %1793 = vmatpush1.msra.mxu0 %v1625
    %1794 = vmatprep.subr.mxu0 %v1630
    %1795 = vmatpush1.msra.mxu0 %v1629
    %1796 = vmatprep.subr.mxu0 %v1634
    %1797 = vmatpush1.msra.mxu0 %v1633
    %1798 = vmatprep.subr.mxu0 %v1638
    %1799 = vmatpush1.msra.mxu0 %v1637
    %1800 = vmatprep.subr.mxu0 %v1642
    %1801 = vmatpush1.msra.mxu0 %v1641
    %1802 = vmatprep.subr.mxu0 %v1646
    %1803 = vmatpush1.msra.mxu0 %v1645
    %1804 = vmatprep.subr.mxu0 %v1650
    %1805 = vmatpush1.msra.mxu0 %v1649
    %1806 = vmatprep.subr.mxu0 %v1654
    %1807 = vmatpush1.msra.mxu0 %v1653
    %1808 = vmatprep.subr.mxu0 %v1658
    %1809 = vmatpush1.msra.mxu0 %v1657
    %1810 = vmatprep.mubr.f32.mxu0 %v1530
    %1811 = vmatmul.mubr.f32.gmra.mrb[0].mxu0 %v1529
    %v1812 = vpop.f32.mrb[0].mxu0
    %v1813 = vadd.f32 %v1668, %v1812
    %v1814 = vpop.f32.mrb[0].mxu0
    %v1815 = vadd.f32 %v1672, %v1814
    %1816 = vdwg.mxu0
    %v1817 = vxor.u32 %v1743, 2147483648
    %v1818 = vmul.f32 %v1817, 1.442695
    %v1819 = vpow.pop %v1818
    %v1820 = vadd.f32 %v1819, 1.0
    %v1821 = vrcp.pop %v1820
    %v1822 = vmul.f32 1.0, %v1821
    %v1823 = vtanh.pop %v1813
    %v1824 = vxor.u32 %v1815, 2147483648
    %v1825 = vmul.f32 %v1824, 1.442695
    %v1826 = vpow.pop %v1825
    %v1827 = vadd.f32 %v1826, 1.0
    %v1828 = vrcp.pop %v1827
    %v1829 = vmul.f32 1.0, %v1828
    %v1830 = vmul.f32 %v1822, %v1823
    %v1831 = vtanh.pop %v1830
    %v1832 = vmul.f32 %v1829, %v1831
    %v1833 = vld [vmem:[#allocation12] sm:$0xff]
    %v1834 = vld [vmem:[#allocation12 + $0x8] sm:$0xff]
    %v1835 = vld [vmem:[#allocation12 + $0x10] sm:$0xff]
    %v1836 = vld [vmem:[#allocation12 + $0x18] sm:$0xff]
    %v1837 = vld [vmem:[#allocation12 + $0x20] sm:$0xff]
    %v1838 = vld [vmem:[#allocation12 + $0x28] sm:$0xff]
    %v1839 = vld [vmem:[#allocation12 + $0x30] sm:$0xff]
    %v1840 = vld [vmem:[#allocation12 + $0x38] sm:$0xff]
    %v1841 = vld [vmem:[#allocation12 + $0x40] sm:$0xff]
    %v1842 = vld [vmem:[#allocation12 + $0x48] sm:$0xff]
    %v1843 = vld [vmem:[#allocation12 + $0x50] sm:$0xff]
    %v1844 = vld [vmem:[#allocation12 + $0x58] sm:$0xff]
    %v1845 = vld [vmem:[#allocation12 + $0x60] sm:$0xff]
    %v1846 = vld [vmem:[#allocation12 + $0x68] sm:$0xff]
    %v1847 = vld [vmem:[#allocation12 + $0x70] sm:$0xff]
    %v1848 = vld [vmem:[#allocation12 + $0x78] sm:$0xff]
    %v1849 = vld [vmem:[#allocation13] sm:$0x1]
    %v1851 = vlaneseq
    %v1852 = vshrl.u32 %v1851, 7
    %v1853 = vsub.s32 0, %v1852
    %v1854 = vrot.slane %v1849, %v1853
    %1856 = vmatprep.subr.mxu0 0.0
    %1857 = vmatpush1.msra.mxu0 %v1833
    %1858 = vmatprep.subr.mxu0 0.0
    %1859 = vmatpush1.msra.mxu0 %v1834
    %1860 = vmatprep.subr.mxu0 0.0
    %1861 = vmatpush1.msra.mxu0 %v1835
    %1862 = vmatprep.subr.mxu0 0.0
    %1863 = vmatpush1.msra.mxu0 %v1836
    %1864 = vmatprep.subr.mxu0 0.0
    %1865 = vmatpush1.msra.mxu0 %v1837
    %1866 = vmatprep.subr.mxu0 0.0
    %1867 = vmatpush1.msra.mxu0 %v1838
    %1868 = vmatprep.subr.mxu0 0.0
    %1869 = vmatpush1.msra.mxu0 %v1839
    %1870 = vmatprep.subr.mxu0 0.0
    %1871 = vmatpush1.msra.mxu0 %v1840
    %1872 = vmatprep.subr.mxu0 0.0
    %1873 = vmatpush1.msra.mxu0 %v1841
    %1874 = vmatprep.subr.mxu0 0.0
    %1875 = vmatpush1.msra.mxu0 %v1842
    %1876 = vmatprep.subr.mxu0 0.0
    %1877 = vmatpush1.msra.mxu0 %v1843
    %1878 = vmatprep.subr.mxu0 0.0
    %1879 = vmatpush1.msra.mxu0 %v1844
    %1880 = vmatprep.subr.mxu0 0.0
    %1881 = vmatpush1.msra.mxu0 %v1845
    %1882 = vmatprep.subr.mxu0 0.0
    %1883 = vmatpush1.msra.mxu0 %v1846
    %1884 = vmatprep.subr.mxu0 0.0
    %1885 = vmatpush1.msra.mxu0 %v1847
    %1886 = vmatprep.subr.mxu0 0.0
    %1887 = vmatpush1.msra.mxu0 %v1848
    %1888 = vmatprep.subr.mxu0 0.0
    %1889 = vmatpush1.msra.mxu0 0.0
    %1890 = vmatprep.subr.mxu0 0.0
    %1891 = vmatpush1.msra.mxu0 0.0
    %1892 = vmatprep.subr.mxu0 0.0
    %1893 = vmatpush1.msra.mxu0 0.0
    %1894 = vmatprep.subr.mxu0 0.0
    %1895 = vmatpush1.msra.mxu0 0.0
    %1896 = vmatprep.subr.mxu0 0.0
    %1897 = vmatpush1.msra.mxu0 0.0
    %1898 = vmatprep.subr.mxu0 0.0
    %1899 = vmatpush1.msra.mxu0 0.0
    %1900 = vmatprep.subr.mxu0 0.0
    %1901 = vmatpush1.msra.mxu0 0.0
    %1902 = vmatprep.subr.mxu0 0.0
    %1903 = vmatpush1.msra.mxu0 0.0
    %1904 = vmatprep.subr.mxu0 0.0
    %1905 = vmatpush1.msra.mxu0 0.0
    %1906 = vmatprep.subr.mxu0 0.0
    %1907 = vmatpush1.msra.mxu0 0.0
    %1908 = vmatprep.subr.mxu0 0.0
    %1909 = vmatpush1.msra.mxu0 0.0
    %1910 = vmatprep.subr.mxu0 0.0
    %1911 = vmatpush1.msra.mxu0 0.0
    %1912 = vmatprep.subr.mxu0 0.0
    %1913 = vmatpush1.msra.mxu0 0.0
    %1914 = vmatprep.subr.mxu0 0.0
    %1915 = vmatpush1.msra.mxu0 0.0
    %1916 = vmatprep.subr.mxu0 0.0
    %1917 = vmatpush1.msra.mxu0 0.0
    %1918 = vmatprep.subr.mxu0 0.0
    %1919 = vmatpush1.msra.mxu0 0.0
    %1920 = vmatprep.mubr.f32.mxu0 0.0
    %1921 = vmatmul.mubr.f32.gmra.mrb[0].mxu0 %v1832
    %v1922 = vpop.f32.mrb[0].mxu0
    %v1923 = vadd.f32 %v1854, %v1922
    %v1924 = vpop.f32.mrb[0].mxu0
    %1925 = vdwg.mxu0
    %1926 = vst [vmem:[%s9] sm:$0xff] %v1923
    // Predicated region
    $region70: #{forward.1} parent=1 // pred_check
      _
    $region71: #{forward.1} parent=1 // pred_check_branch
      %1928 = sbr.rel (0) target = $region73
    $region72: #{forward.1} parent=1 // pred_region
      _
    $region73: #{forward.1} parent=1 // pred_fallthru
      _
    // Predicated region
    $region74: #{forward.1} parent=1 // pred_check
      _
    $region75: #{forward.1} parent=1 // pred_check_branch
      %1930 = sbr.rel (0) target = $region77
    $region76: #{forward.1} parent=1 // pred_region
      _
    $region77: #{forward.1} parent=1 // pred_fallthru
      _
    %1931 = vsyncpa [#allocation3], 1
    %1932 = vsyncpa [#allocation5], 1
    %1933 = vsyncpa [#allocation8], 1
    %1934 = vsyncpa [#allocation11], 1
    %1935 = vsyncpa [#allocation14], 1

</llo_original>
